<compile_context>
chip_gen: v7x
topology: tpu7x:2x2x1
jax: 0.10.0
libtpu: 0.0.40
codegen_flags: <defaults>
</compile_context>

<pallas_src>
import functools

import jax
import jax.numpy as jnp
from jax.experimental import pallas as pl
from jax.experimental.pallas import tpu as pltpu


def _silu(v):
    return v * jax.nn.sigmoid(v)


def _round_up(x, m):
    return ((x + m - 1) // m) * m


def _pad2(a, rows, cols):
    return jnp.pad(a, ((0, rows - a.shape[0]), (0, cols - a.shape[1])))


def _fused_deepsets_kernel(x_ref, pool_ref,
                           w1_ref, b1_ref, w2_ref, b2_ref, w3_ref, b3_ref,
                           lnw_ref, lnb_ref,
                           rw1_ref, rb1_ref, rw2_ref, rb2_ref, rw3_ref, rb3_ref,
                           out_ref,
                           *, d_valid):
    """One grid step = one branch (scalar or vector), all B*N set rows at once."""
    eps = 1e-5
    branch = pl.program_id(0)
    d_b = jnp.where(branch == 0, d_valid[0], d_valid[1])               # valid lanes
    inv_d = jnp.where(branch == 0, 1.0 / d_valid[0], 1.0 / d_valid[1])

    x = x_ref[0]                                                       # (B*N, Dp)

    # phi MLP: Linear(D,2D)+SiLU, Linear(2D,2D)+SiLU, Linear(2D,D)+SiLU.
    # Padded weight rows/cols and bias lanes are zero -> padded lanes of h are 0.
    h = _silu(jnp.dot(x, w1_ref[0], preferred_element_type=jnp.float32) + b1_ref[0])
    h = _silu(jnp.dot(h, w2_ref[0], preferred_element_type=jnp.float32) + b2_ref[0])
    h = _silu(jnp.dot(h, w3_ref[0], preferred_element_type=jnp.float32) + b3_ref[0])

    # LayerNorm over only the valid feature lanes (iota mask; exact vs unpadded).
    rows, d_pad = h.shape
    lane = jax.lax.broadcasted_iota(jnp.int32, (rows, d_pad), 1)
    mask = (lane < d_b).astype(jnp.float32)
    mu = jnp.sum(h, axis=-1, keepdims=True) * inv_d        # padded lanes of h are 0
    diff = (h - mu) * mask
    var = jnp.sum(diff * diff, axis=-1, keepdims=True) * inv_d
    hn = diff * jax.lax.rsqrt(var + eps) * lnw_ref[0] + lnb_ref[0]

    # Permutation-invariant aggregation: segmented mean over the set axis as a
    # block-diagonal matmul (pool[b, b*N+n] = 1/N) -> stays on the MXU.
    agg = jnp.dot(pool_ref[...], hn, preferred_element_type=jnp.float32)   # (B, Dp)

    # rho MLP: Linear(D,2D)+SiLU, Linear(2D,2D)+SiLU, Linear(2D,D).
    r = _silu(jnp.dot(agg, rw1_ref[0], preferred_element_type=jnp.float32) + rb1_ref[0])
    r = _silu(jnp.dot(r, rw2_ref[0], preferred_element_type=jnp.float32) + rb2_ref[0])
    r = jnp.dot(r, rw3_ref[0], preferred_element_type=jnp.float32) + rb3_ref[0]

    out_ref[...] = r[jnp.newaxis]                                      # (1, B, Dp)


def fused_deepsets_forward(scalar, vector_flat, scalar_params, vector_params):
    """scalar: (B,N,Ds); vector_flat: (B,N,Dv). Returns ((B,Ds), (B,Dv))."""
    B, N, d_s = scalar.shape
    d_v = vector_flat.shape[-1]
    d_pad = _round_up(max(d_s, d_v), 128)
    h_pad = _round_up(max(2 * d_s, 2 * d_v), 128)

    # Pad + stack inputs on a leading branch axis: (2, B*N, d_pad), lane-dense.
    xs = jnp.pad(scalar.reshape(B * N, d_s), ((0, 0), (0, d_pad - d_s)))
    xv = jnp.pad(vector_flat.reshape(B * N, d_v), ((0, 0), (0, d_pad - d_v)))
    x = jnp.stack([xs, xv], axis=0)

    # Block-diagonal set-mean matrix, shared by both branches: (B, B*N).
    pool = jnp.repeat(jnp.eye(B, dtype=jnp.float32), N, axis=1) / float(N)

    # Pad + stack the 14 per-branch params to common shapes.
    # Order: w1,b1,w2,b2,w3,b3,lnw,lnb,rw1,rb1,rw2,rb2,rw3,rb3
    pad_shapes = [(d_pad, h_pad), (1, h_pad), (h_pad, h_pad), (1, h_pad),
                  (h_pad, d_pad), (1, d_pad), (1, d_pad), (1, d_pad),
                  (d_pad, h_pad), (1, h_pad), (h_pad, h_pad), (1, h_pad),
                  (h_pad, d_pad), (1, d_pad)]
    stacked = [jnp.stack([_pad2(ps, *shp), _pad2(pv, *shp)], axis=0)
               for ps, pv, shp in zip(scalar_params, vector_params, pad_shapes)]

    kernel = functools.partial(_fused_deepsets_kernel, d_valid=(d_s, d_v))

    def block3(a):
        return pl.BlockSpec((1,) + a.shape[1:], lambda i: (i, 0, 0))

    in_specs = ([block3(x),
                 pl.BlockSpec(pool.shape, lambda i: (0, 0))]   # branch-independent
                + [block3(p) for p in stacked])
    out_specs = pl.BlockSpec((1, B, d_pad), lambda i: (i, 0, 0))

    out = pl.pallas_call(
        kernel,
        out_shape=jax.ShapeDtypeStruct((2, B, d_pad), jnp.float32),
        grid=(2,),
        in_specs=in_specs,
        out_specs=out_specs,
        compiler_params=pltpu.CompilerParams(
            dimension_semantics=("parallel",)),
    )(x, pool, *stacked)

    return out[0, :, :d_s], out[1, :, :d_v]


def improved_deep_sets_forward(scalar, vector, scalar_params, vector_params, vector_dim):
    """Full ImprovedDeepSets.forward (both branches present, as in the demo).

    scalar: (B, N, scalar_dim); vector: (B, N, vector_dim, 3).
    Returns (scalar_out (B, scalar_dim), vector_out (B, vector_dim, 3)).
    """
    # TODO(synk): scalar-only / vector-only configs would reuse the same kernel
    # with grid=(1,) and a single stacked branch; omitted in this demo.
    B, N = vector.shape[0], vector.shape[1]
    vector_flat = vector.reshape(B, N, vector_dim * 3)
    scalar_out, vector_out_flat = fused_deepsets_forward(
        scalar, vector_flat, scalar_params, vector_params)
    return scalar_out, vector_out_flat.reshape(B, vector_dim, 3)


def _init_linear(key, fan_in, fan_out):
    """PyTorch-style Linear init; weight returned already transposed to (in, out)."""
    kw, kb = jax.random.split(key)
    bound = 1.0 / jnp.sqrt(fan_in)
    w = jax.random.uniform(kw, (fan_in, fan_out), jnp.float32, -bound, bound)
    b = jax.random.uniform(kb, (1, fan_out), jnp.float32, -bound, bound)
    return w, b


def init_branch_params(key, d):
    """Params for one Deep Sets branch with feature dim d (hidden = 2*d)."""
    keys = jax.random.split(key, 6)
    w1, b1 = _init_linear(keys[0], d, 2 * d)
    w2, b2 = _init_linear(keys[1], 2 * d, 2 * d)
    w3, b3 = _init_linear(keys[2], 2 * d, d)
    lnw = jnp.ones((1, d), jnp.float32)
    lnb = jnp.zeros((1, d), jnp.float32)
    rw1, rb1 = _init_linear(keys[3], d, 2 * d)
    rw2, rb2 = _init_linear(keys[4], 2 * d, 2 * d)
    rw3, rb3 = _init_linear(keys[5], 2 * d, d)
    return (w1, b1, w2, b2, w3, b3, lnw, lnb, rw1, rb1, rw2, rb2, rw3, rb3)


def deepsets_branch_reference(x, params):
    """Pure-JAX reference mirroring the PyTorch forward for one branch."""
    (w1, b1, w2, b2, w3, b3, lnw, lnb, rw1, rb1, rw2, rb2, rw3, rb3) = params
    h = _silu(x @ w1 + b1)
    h = _silu(h @ w2 + b2)
    h = _silu(h @ w3 + b3)
    mu = jnp.mean(h, axis=-1, keepdims=True)
    var = jnp.mean((h - mu) ** 2, axis=-1, keepdims=True)
    hn = (h - mu) * jax.lax.rsqrt(var + 1e-5) * lnw + lnb
    agg = jnp.mean(hn, axis=1)  # (B, D)
    r = _silu(agg @ rw1 + rb1)
    r = _silu(r @ rw2 + rb2)
    return r @ rw3 + rb3


if __name__ == "__main__":
    B, N = 2, 8            # batch, set size (conformers)
    scalar_dim = 32
    vector_dim = 8

    key = jax.random.PRNGKey(0)
    k_s, k_v, k_ps, k_pv = jax.random.split(key, 4)

    scalar = jax.random.normal(k_s, (B, N, scalar_dim), jnp.float32)
    vector = jax.random.normal(k_v, (B, N, vector_dim, 3), jnp.float32)

    scalar_params = init_branch_params(k_ps, scalar_dim)
    vector_params = init_branch_params(k_pv, vector_dim * 3)

    scalar_out, vector_out = improved_deep_sets_forward(
        scalar, vector, scalar_params, vector_params, vector_dim)
    jax.block_until_ready((scalar_out, vector_out))

    # Sanity check against a pure-JAX reference of the PyTorch forward.
    ref_s = deepsets_branch_reference(scalar, scalar_params)
    ref_v = deepsets_branch_reference(
        vector.reshape(B, N, vector_dim * 3), vector_params).reshape(B, vector_dim, 3)
    assert scalar_out.shape == (B, scalar_dim)
    assert vector_out.shape == (B, vector_dim, 3)
    assert jnp.allclose(scalar_out, ref_s, atol=1e-4, rtol=1e-4)
    assert jnp.allclose(vector_out, ref_v, atol=1e-4, rtol=1e-4)

    print("KERNEL_OK")
</pallas_src>

<mosaic_0001>
module attributes {stable_mosaic.version = 11 : i64} {
  func.func @_fused_deepsets_kernel(%arg0: i32, %arg1: memref<1x16x128xf32, #tpu.memory_space<vmem>>, %arg2: memref<2x16xf32, #tpu.memory_space<vmem>>, %arg3: memref<1x128x128xf32, #tpu.memory_space<vmem>>, %arg4: memref<1x1x128xf32, #tpu.memory_space<vmem>>, %arg5: memref<1x128x128xf32, #tpu.memory_space<vmem>>, %arg6: memref<1x1x128xf32, #tpu.memory_space<vmem>>, %arg7: memref<1x128x128xf32, #tpu.memory_space<vmem>>, %arg8: memref<1x1x128xf32, #tpu.memory_space<vmem>>, %arg9: memref<1x1x128xf32, #tpu.memory_space<vmem>>, %arg10: memref<1x1x128xf32, #tpu.memory_space<vmem>>, %arg11: memref<1x128x128xf32, #tpu.memory_space<vmem>>, %arg12: memref<1x1x128xf32, #tpu.memory_space<vmem>>, %arg13: memref<1x128x128xf32, #tpu.memory_space<vmem>>, %arg14: memref<1x1x128xf32, #tpu.memory_space<vmem>>, %arg15: memref<1x128x128xf32, #tpu.memory_space<vmem>>, %arg16: memref<1x1x128xf32, #tpu.memory_space<vmem>>, %arg17: memref<1x2x128xf32, #tpu.memory_space<vmem>>) attributes {dimension_semantics = [#tpu.dimension_semantics<parallel>], iteration_bounds = array<i64: 2>, scalar_prefetch = 0 : i64, scratch_operands = 0 : i64, tpu.core_type = #tpu.core_type<tc>, window_params = [{transform_indices = @transform_0, window_bounds = array<i64: 1, 16, 128>}, {pipeline_mode = #tpu.pipeline_mode<synchronous>, transform_indices = @transform_1, window_bounds = array<i64: 2, 16>}, {transform_indices = @transform_2, window_bounds = array<i64: 1, 128, 128>}, {transform_indices = @transform_3, window_bounds = array<i64: 1, 1, 128>}, {transform_indices = @transform_4, window_bounds = array<i64: 1, 128, 128>}, {transform_indices = @transform_5, window_bounds = array<i64: 1, 1, 128>}, {transform_indices = @transform_6, window_bounds = array<i64: 1, 128, 128>}, {transform_indices = @transform_7, window_bounds = array<i64: 1, 1, 128>}, {transform_indices = @transform_8, window_bounds = array<i64: 1, 1, 128>}, {transform_indices = @transform_9, window_bounds = array<i64: 1, 1, 128>}, {transform_indices = @transform_10, window_bounds = array<i64: 1, 128, 128>}, {transform_indices = @transform_11, window_bounds = array<i64: 1, 1, 128>}, {transform_indices = @transform_12, window_bounds = array<i64: 1, 128, 128>}, {transform_indices = @transform_13, window_bounds = array<i64: 1, 1, 128>}, {transform_indices = @transform_14, window_bounds = array<i64: 1, 128, 128>}, {transform_indices = @transform_15, window_bounds = array<i64: 1, 1, 128>}, {transform_indices = @transform_16, window_bounds = array<i64: 1, 2, 128>}]} {
    %c0_i32 = arith.constant 0 : i32
    %0 = arith.cmpi eq, %arg0, %c0_i32 : i32
    %c32_i32 = arith.constant 32 : i32
    %c24_i32 = arith.constant 24 : i32
    %1 = arith.select %0, %c32_i32, %c24_i32 : i32
    %c0_i32_0 = arith.constant 0 : i32
    %2 = arith.cmpi eq, %arg0, %c0_i32_0 : i32
    %cst = arith.constant 3.125000e-02 : f32
    %cst_1 = arith.constant 0.0416666679 : f32
    %3 = arith.select %2, %cst, %cst_1 : f32
    %c0 = arith.constant 0 : index
    %c0_2 = arith.constant 0 : index
    %c0_3 = arith.constant 0 : index
    %4 = vector.load %arg1[%c0, %c0_2, %c0_3] : memref<1x16x128xf32, #tpu.memory_space<vmem>>, vector<1x16x128xf32>
    %5 = vector.shape_cast %4 : vector<1x16x128xf32> to vector<16x128xf32>
    %c0_4 = arith.constant 0 : index
    %c0_5 = arith.constant 0 : index
    %c0_6 = arith.constant 0 : index
    %6 = vector.load %arg3[%c0_4, %c0_5, %c0_6] : memref<1x128x128xf32, #tpu.memory_space<vmem>>, vector<1x128x128xf32>
    %7 = vector.shape_cast %6 : vector<1x128x128xf32> to vector<128x128xf32>
    %cst_7 = arith.constant dense<0.000000e+00> : vector<16x128xf32>
    %8 = tpu.matmul %5, %7, %cst_7 {dimension_numbers = #tpu.dot_dimension_numbers<[1], [0], [0], [1], [0, 0, 1, 1], [], []>} : vector<16x128xf32>, vector<128x128xf32>, vector<16x128xf32> -> vector<16x128xf32>
    %c0_8 = arith.constant 0 : index
    %c0_9 = arith.constant 0 : index
    %c0_10 = arith.constant 0 : index
    %9 = vector.load %arg4[%c0_8, %c0_9, %c0_10] : memref<1x1x128xf32, #tpu.memory_space<vmem>>, vector<1x1x128xf32>
    %10 = vector.shape_cast %9 : vector<1x1x128xf32> to vector<1x128xf32>
    %11 = vector.broadcast %10 : vector<1x128xf32> to vector<16x128xf32>
    %12 = arith.addf %8, %11 : vector<16x128xf32>
    %13 = arith.negf %12 : vector<16x128xf32>
    %14 = math.exp %13 : vector<16x128xf32>
    %cst_11 = arith.constant 1.000000e+00 : f32
    %15 = vector.broadcast %cst_11 : f32 to vector<16x128xf32>
    %16 = arith.addf %15, %14 : vector<16x128xf32>
    %17 = arith.divf %15, %16 : vector<16x128xf32>
    %18 = arith.mulf %12, %17 : vector<16x128xf32>
    %c0_12 = arith.constant 0 : index
    %c0_13 = arith.constant 0 : index
    %c0_14 = arith.constant 0 : index
    %19 = vector.load %arg5[%c0_12, %c0_13, %c0_14] : memref<1x128x128xf32, #tpu.memory_space<vmem>>, vector<1x128x128xf32>
    %20 = vector.shape_cast %19 : vector<1x128x128xf32> to vector<128x128xf32>
    %cst_15 = arith.constant dense<0.000000e+00> : vector<16x128xf32>
    %21 = tpu.matmul %18, %20, %cst_15 {dimension_numbers = #tpu.dot_dimension_numbers<[1], [0], [0], [1], [0, 0, 1, 1], [], []>} : vector<16x128xf32>, vector<128x128xf32>, vector<16x128xf32> -> vector<16x128xf32>
    %c0_16 = arith.constant 0 : index
    %c0_17 = arith.constant 0 : index
    %c0_18 = arith.constant 0 : index
    %22 = vector.load %arg6[%c0_16, %c0_17, %c0_18] : memref<1x1x128xf32, #tpu.memory_space<vmem>>, vector<1x1x128xf32>
    %23 = vector.shape_cast %22 : vector<1x1x128xf32> to vector<1x128xf32>
    %24 = vector.broadcast %23 : vector<1x128xf32> to vector<16x128xf32>
    %25 = arith.addf %21, %24 : vector<16x128xf32>
    %26 = arith.negf %25 : vector<16x128xf32>
    %27 = math.exp %26 : vector<16x128xf32>
    %cst_19 = arith.constant 1.000000e+00 : f32
    %28 = vector.broadcast %cst_19 : f32 to vector<16x128xf32>
    %29 = arith.addf %28, %27 : vector<16x128xf32>
    %30 = arith.divf %28, %29 : vector<16x128xf32>
    %31 = arith.mulf %25, %30 : vector<16x128xf32>
    %c0_20 = arith.constant 0 : index
    %c0_21 = arith.constant 0 : index
    %c0_22 = arith.constant 0 : index
    %32 = vector.load %arg7[%c0_20, %c0_21, %c0_22] : memref<1x128x128xf32, #tpu.memory_space<vmem>>, vector<1x128x128xf32>
    %33 = vector.shape_cast %32 : vector<1x128x128xf32> to vector<128x128xf32>
    %cst_23 = arith.constant dense<0.000000e+00> : vector<16x128xf32>
    %34 = tpu.matmul %31, %33, %cst_23 {dimension_numbers = #tpu.dot_dimension_numbers<[1], [0], [0], [1], [0, 0, 1, 1], [], []>} : vector<16x128xf32>, vector<128x128xf32>, vector<16x128xf32> -> vector<16x128xf32>
    %c0_24 = arith.constant 0 : index
    %c0_25 = arith.constant 0 : index
    %c0_26 = arith.constant 0 : index
    %35 = vector.load %arg8[%c0_24, %c0_25, %c0_26] : memref<1x1x128xf32, #tpu.memory_space<vmem>>, vector<1x1x128xf32>
    %36 = vector.shape_cast %35 : vector<1x1x128xf32> to vector<1x128xf32>
    %37 = vector.broadcast %36 : vector<1x128xf32> to vector<16x128xf32>
    %38 = arith.addf %34, %37 : vector<16x128xf32>
    %39 = arith.negf %38 : vector<16x128xf32>
    %40 = math.exp %39 : vector<16x128xf32>
    %cst_27 = arith.constant 1.000000e+00 : f32
    %41 = vector.broadcast %cst_27 : f32 to vector<16x128xf32>
    %42 = arith.addf %41, %40 : vector<16x128xf32>
    %43 = arith.divf %41, %42 : vector<16x128xf32>
    %44 = arith.mulf %38, %43 : vector<16x128xf32>
    %45 = tpu.iota {dimensions = array<i32: 1>} : vector<16x128xi32>
    %46 = vector.broadcast %1 : i32 to vector<16x128xi32>
    %47 = arith.cmpi slt, %45, %46 : vector<16x128xi32>
    %48 = arith.extui %47 : vector<16x128xi1> to vector<16x128xi32>
    %49 = arith.sitofp %48 : vector<16x128xi32> to vector<16x128xf32>
    %cst_28 = arith.constant dense<0.000000e+00> : vector<16xf32>
    %50 = vector.multi_reduction <add>, %44, %cst_28 [1] : vector<16x128xf32> to vector<16xf32>
    %51 = vector.shape_cast %50 : vector<16xf32> to vector<16x1xf32>
    %52 = vector.broadcast %3 : f32 to vector<16x1xf32>
    %53 = arith.mulf %51, %52 : vector<16x1xf32>
    %54 = vector.broadcast %53 : vector<16x1xf32> to vector<16x128xf32>
    %55 = arith.subf %44, %54 : vector<16x128xf32>
    %56 = arith.mulf %55, %49 : vector<16x128xf32>
    %57 = arith.mulf %56, %56 : vector<16x128xf32>
    %cst_29 = arith.constant dense<0.000000e+00> : vector<16xf32>
    %58 = vector.multi_reduction <add>, %57, %cst_29 [1] : vector<16x128xf32> to vector<16xf32>
    %59 = vector.shape_cast %58 : vector<16xf32> to vector<16x1xf32>
    %60 = vector.broadcast %3 : f32 to vector<16x1xf32>
    %61 = arith.mulf %59, %60 : vector<16x1xf32>
    %cst_30 = arith.constant 9.99999974E-6 : f32
    %62 = vector.broadcast %cst_30 : f32 to vector<16x1xf32>
    %63 = arith.addf %61, %62 : vector<16x1xf32>
    %64 = math.rsqrt %63 : vector<16x1xf32>
    %65 = vector.broadcast %64 : vector<16x1xf32> to vector<16x128xf32>
    %66 = arith.mulf %56, %65 : vector<16x128xf32>
    %c0_31 = arith.constant 0 : index
    %c0_32 = arith.constant 0 : index
    %c0_33 = arith.constant 0 : index
    %67 = vector.load %arg9[%c0_31, %c0_32, %c0_33] : memref<1x1x128xf32, #tpu.memory_space<vmem>>, vector<1x1x128xf32>
    %68 = vector.shape_cast %67 : vector<1x1x128xf32> to vector<1x128xf32>
    %69 = vector.broadcast %68 : vector<1x128xf32> to vector<16x128xf32>
    %70 = arith.mulf %66, %69 : vector<16x128xf32>
    %c0_34 = arith.constant 0 : index
    %c0_35 = arith.constant 0 : index
    %c0_36 = arith.constant 0 : index
    %71 = vector.load %arg10[%c0_34, %c0_35, %c0_36] : memref<1x1x128xf32, #tpu.memory_space<vmem>>, vector<1x1x128xf32>
    %72 = vector.shape_cast %71 : vector<1x1x128xf32> to vector<1x128xf32>
    %73 = vector.broadcast %72 : vector<1x128xf32> to vector<16x128xf32>
    %74 = arith.addf %70, %73 : vector<16x128xf32>
    %c0_37 = arith.constant 0 : index
    %c0_38 = arith.constant 0 : index
    %75 = vector.load %arg2[%c0_37, %c0_38] : memref<2x16xf32, #tpu.memory_space<vmem>>, vector<2x16xf32>
    %cst_39 = arith.constant dense<0.000000e+00> : vector<2x128xf32>
    %76 = tpu.matmul %75, %74, %cst_39 {dimension_numbers = #tpu.dot_dimension_numbers<[1], [0], [0], [1], [0, 0, 1, 1], [], []>} : vector<2x16xf32>, vector<16x128xf32>, vector<2x128xf32> -> vector<2x128xf32>
    %c0_40 = arith.constant 0 : index
    %c0_41 = arith.constant 0 : index
    %c0_42 = arith.constant 0 : index
    %77 = vector.load %arg11[%c0_40, %c0_41, %c0_42] : memref<1x128x128xf32, #tpu.memory_space<vmem>>, vector<1x128x128xf32>
    %78 = vector.shape_cast %77 : vector<1x128x128xf32> to vector<128x128xf32>
    %cst_43 = arith.constant dense<0.000000e+00> : vector<2x128xf32>
    %79 = tpu.matmul %76, %78, %cst_43 {dimension_numbers = #tpu.dot_dimension_numbers<[1], [0], [0], [1], [0, 0, 1, 1], [], []>} : vector<2x128xf32>, vector<128x128xf32>, vector<2x128xf32> -> vector<2x128xf32>
    %c0_44 = arith.constant 0 : index
    %c0_45 = arith.constant 0 : index
    %c0_46 = arith.constant 0 : index
    %80 = vector.load %arg12[%c0_44, %c0_45, %c0_46] : memref<1x1x128xf32, #tpu.memory_space<vmem>>, vector<1x1x128xf32>
    %81 = vector.shape_cast %80 : vector<1x1x128xf32> to vector<1x128xf32>
    %82 = vector.broadcast %81 : vector<1x128xf32> to vector<2x128xf32>
    %83 = arith.addf %79, %82 : vector<2x128xf32>
    %84 = arith.negf %83 : vector<2x128xf32>
    %85 = math.exp %84 : vector<2x128xf32>
    %cst_47 = arith.constant 1.000000e+00 : f32
    %86 = vector.broadcast %cst_47 : f32 to vector<2x128xf32>
    %87 = arith.addf %86, %85 : vector<2x128xf32>
    %88 = arith.divf %86, %87 : vector<2x128xf32>
    %89 = arith.mulf %83, %88 : vector<2x128xf32>
    %c0_48 = arith.constant 0 : index
    %c0_49 = arith.constant 0 : index
    %c0_50 = arith.constant 0 : index
    %90 = vector.load %arg13[%c0_48, %c0_49, %c0_50] : memref<1x128x128xf32, #tpu.memory_space<vmem>>, vector<1x128x128xf32>
    %91 = vector.shape_cast %90 : vector<1x128x128xf32> to vector<128x128xf32>
    %cst_51 = arith.constant dense<0.000000e+00> : vector<2x128xf32>
    %92 = tpu.matmul %89, %91, %cst_51 {dimension_numbers = #tpu.dot_dimension_numbers<[1], [0], [0], [1], [0, 0, 1, 1], [], []>} : vector<2x128xf32>, vector<128x128xf32>, vector<2x128xf32> -> vector<2x128xf32>
    %c0_52 = arith.constant 0 : index
    %c0_53 = arith.constant 0 : index
    %c0_54 = arith.constant 0 : index
    %93 = vector.load %arg14[%c0_52, %c0_53, %c0_54] : memref<1x1x128xf32, #tpu.memory_space<vmem>>, vector<1x1x128xf32>
    %94 = vector.shape_cast %93 : vector<1x1x128xf32> to vector<1x128xf32>
    %95 = vector.broadcast %94 : vector<1x128xf32> to vector<2x128xf32>
    %96 = arith.addf %92, %95 : vector<2x128xf32>
    %97 = arith.negf %96 : vector<2x128xf32>
    %98 = math.exp %97 : vector<2x128xf32>
    %cst_55 = arith.constant 1.000000e+00 : f32
    %99 = vector.broadcast %cst_55 : f32 to vector<2x128xf32>
    %100 = arith.addf %99, %98 : vector<2x128xf32>
    %101 = arith.divf %99, %100 : vector<2x128xf32>
    %102 = arith.mulf %96, %101 : vector<2x128xf32>
    %c0_56 = arith.constant 0 : index
    %c0_57 = arith.constant 0 : index
    %c0_58 = arith.constant 0 : index
    %103 = vector.load %arg15[%c0_56, %c0_57, %c0_58] : memref<1x128x128xf32, #tpu.memory_space<vmem>>, vector<1x128x128xf32>
    %104 = vector.shape_cast %103 : vector<1x128x128xf32> to vector<128x128xf32>
    %cst_59 = arith.constant dense<0.000000e+00> : vector<2x128xf32>
    %105 = tpu.matmul %102, %104, %cst_59 {dimension_numbers = #tpu.dot_dimension_numbers<[1], [0], [0], [1], [0, 0, 1, 1], [], []>} : vector<2x128xf32>, vector<128x128xf32>, vector<2x128xf32> -> vector<2x128xf32>
    %c0_60 = arith.constant 0 : index
    %c0_61 = arith.constant 0 : index
    %c0_62 = arith.constant 0 : index
    %106 = vector.load %arg16[%c0_60, %c0_61, %c0_62] : memref<1x1x128xf32, #tpu.memory_space<vmem>>, vector<1x1x128xf32>
    %107 = vector.shape_cast %106 : vector<1x1x128xf32> to vector<1x128xf32>
    %108 = vector.broadcast %107 : vector<1x128xf32> to vector<2x128xf32>
    %109 = arith.addf %105, %108 : vector<2x128xf32>
    %110 = vector.shape_cast %109 : vector<2x128xf32> to vector<1x2x128xf32>
    %c0_63 = arith.constant 0 : index
    %c0_64 = arith.constant 0 : index
    %c0_65 = arith.constant 0 : index
    %111 = vector.load %arg17[%c0_63, %c0_64, %c0_65] : memref<1x2x128xf32, #tpu.memory_space<vmem>>, vector<1x2x128xf32>
    tpu.vector_store %arg17[%c0_63, %c0_64, %c0_65], %110 {strides = array<i32>} : memref<1x2x128xf32, #tpu.memory_space<vmem>>, vector<1x2x128xf32>,
    return
  }
  func.func @transform_0(%arg0: i32) -> (i32, i32, i32) {
    %c0_i32 = arith.constant 0 : i32
    %c0_i32_0 = arith.constant 0 : i32
    %c0_i32_1 = arith.constant 0 : i32
    return %arg0, %c0_i32, %c0_i32_0 : i32, i32, i32
  }
  func.func @transform_1(%arg0: i32) -> (i32, i32) {
    %c0_i32 = arith.constant 0 : i32
    %c0_i32_0 = arith.constant 0 : i32
    %c0_i32_1 = arith.constant 0 : i32
    return %c0_i32, %c0_i32_0 : i32, i32
  }
  func.func @transform_2(%arg0: i32) -> (i32, i32, i32) {
    %c0_i32 = arith.constant 0 : i32
    %c0_i32_0 = arith.constant 0 : i32
    %c0_i32_1 = arith.constant 0 : i32
    return %arg0, %c0_i32, %c0_i32_0 : i32, i32, i32
  }
  func.func @transform_3(%arg0: i32) -> (i32, i32, i32) {
    %c0_i32 = arith.constant 0 : i32
    %c0_i32_0 = arith.constant 0 : i32
    %c0_i32_1 = arith.constant 0 : i32
    return %arg0, %c0_i32, %c0_i32_0 : i32, i32, i32
  }
  func.func @transform_4(%arg0: i32) -> (i32, i32, i32) {
    %c0_i32 = arith.constant 0 : i32
    %c0_i32_0 = arith.constant 0 : i32
    %c0_i32_1 = arith.constant 0 : i32
    return %arg0, %c0_i32, %c0_i32_0 : i32, i32, i32
  }
  func.func @transform_5(%arg0: i32) -> (i32, i32, i32) {
    %c0_i32 = arith.constant 0 : i32
    %c0_i32_0 = arith.constant 0 : i32
    %c0_i32_1 = arith.constant 0 : i32
    return %arg0, %c0_i32, %c0_i32_0 : i32, i32, i32
  }
  func.func @transform_6(%arg0: i32) -> (i32, i32, i32) {
    %c0_i32 = arith.constant 0 : i32
    %c0_i32_0 = arith.constant 0 : i32
    %c0_i32_1 = arith.constant 0 : i32
    return %arg0, %c0_i32, %c0_i32_0 : i32, i32, i32
  }
  func.func @transform_7(%arg0: i32) -> (i32, i32, i32) {
    %c0_i32 = arith.constant 0 : i32
    %c0_i32_0 = arith.constant 0 : i32
    %c0_i32_1 = arith.constant 0 : i32
    return %arg0, %c0_i32, %c0_i32_0 : i32, i32, i32
  }
  func.func @transform_8(%arg0: i32) -> (i32, i32, i32) {
    %c0_i32 = arith.constant 0 : i32
    %c0_i32_0 = arith.constant 0 : i32
    %c0_i32_1 = arith.constant 0 : i32
    return %arg0, %c0_i32, %c0_i32_0 : i32, i32, i32
  }
  func.func @transform_9(%arg0: i32) -> (i32, i32, i32) {
    %c0_i32 = arith.constant 0 : i32
    %c0_i32_0 = arith.constant 0 : i32
    %c0_i32_1 = arith.constant 0 : i32
    return %arg0, %c0_i32, %c0_i32_0 : i32, i32, i32
  }
  func.func @transform_10(%arg0: i32) -> (i32, i32, i32) {
    %c0_i32 = arith.constant 0 : i32
    %c0_i32_0 = arith.constant 0 : i32
    %c0_i32_1 = arith.constant 0 : i32
    return %arg0, %c0_i32, %c0_i32_0 : i32, i32, i32
  }
  func.func @transform_11(%arg0: i32) -> (i32, i32, i32) {
    %c0_i32 = arith.constant 0 : i32
    %c0_i32_0 = arith.constant 0 : i32
    %c0_i32_1 = arith.constant 0 : i32
    return %arg0, %c0_i32, %c0_i32_0 : i32, i32, i32
  }
  func.func @transform_12(%arg0: i32) -> (i32, i32, i32) {
    %c0_i32 = arith.constant 0 : i32
    %c0_i32_0 = arith.constant 0 : i32
    %c0_i32_1 = arith.constant 0 : i32
    return %arg0, %c0_i32, %c0_i32_0 : i32, i32, i32
  }
  func.func @transform_13(%arg0: i32) -> (i32, i32, i32) {
    %c0_i32 = arith.constant 0 : i32
    %c0_i32_0 = arith.constant 0 : i32
    %c0_i32_1 = arith.constant 0 : i32
    return %arg0, %c0_i32, %c0_i32_0 : i32, i32, i32
  }
  func.func @transform_14(%arg0: i32) -> (i32, i32, i32) {
    %c0_i32 = arith.constant 0 : i32
    %c0_i32_0 = arith.constant 0 : i32
    %c0_i32_1 = arith.constant 0 : i32
    return %arg0, %c0_i32, %c0_i32_0 : i32, i32, i32
  }
  func.func @transform_15(%arg0: i32) -> (i32, i32, i32) {
    %c0_i32 = arith.constant 0 : i32
    %c0_i32_0 = arith.constant 0 : i32
    %c0_i32_1 = arith.constant 0 : i32
    return %arg0, %c0_i32, %c0_i32_0 : i32, i32, i32
  }
  func.func @transform_16(%arg0: i32) -> (i32, i32, i32) {
    %c0_i32 = arith.constant 0 : i32
    %c0_i32_0 = arith.constant 0 : i32
    %c0_i32_1 = arith.constant 0 : i32
    return %arg0, %c0_i32, %c0_i32_0 : i32, i32, i32
  }
}

</mosaic_0001>

<llo_original>
// kernel: tpu_custom_call.1
$region0: #{tpu_custom_call.1}
  #allocation0 [shape = 'u32[]', space=smem, size = 0x4, offset = 0x4, fixed_abs, tag = 'smem constant byte address 0x4 - core index']
  #allocation1 [shape = 'u32[144,128]{1,0:T(1,128)}', space=vmem, size = 0x12000, scoped, tag = 'internal scratch']
  %s0 = inlined_call_operand.hbm [shape: f32[2,16,128], index: 0, kind: input, shape index: {}]
  %s1 = inlined_call_operand.vmem [shape: f32[2,16], index: 1, kind: input, shape index: {}]
  %s2 = inlined_call_operand.hbm [shape: f32[2,128,128], index: 2, kind: input, shape index: {}]
  %s3 = inlined_call_operand.vmem [shape: f32[2,1,128], index: 3, kind: input, shape index: {}]
  %s4 = inlined_call_operand.hbm [shape: f32[2,128,128], index: 4, kind: input, shape index: {}]
  %s5 = inlined_call_operand.vmem [shape: f32[2,1,128], index: 5, kind: input, shape index: {}]
  %s6 = inlined_call_operand.hbm [shape: f32[2,128,128], index: 6, kind: input, shape index: {}]
  %s7 = inlined_call_operand.vmem [shape: f32[2,1,128], index: 7, kind: input, shape index: {}]
  %s8 = inlined_call_operand.vmem [shape: f32[2,1,128], index: 8, kind: input, shape index: {}]
  %s9 = inlined_call_operand.vmem [shape: f32[2,1,128], index: 9, kind: input, shape index: {}]
  %s10 = inlined_call_operand.hbm [shape: f32[2,128,128], index: 10, kind: input, shape index: {}]
  %s11 = inlined_call_operand.vmem [shape: f32[2,1,128], index: 11, kind: input, shape index: {}]
  %s12 = inlined_call_operand.hbm [shape: f32[2,128,128], index: 12, kind: input, shape index: {}]
  %s13 = inlined_call_operand.vmem [shape: f32[2,1,128], index: 13, kind: input, shape index: {}]
  %s14 = inlined_call_operand.hbm [shape: f32[2,128,128], index: 14, kind: input, shape index: {}]
  %s15 = inlined_call_operand.vmem [shape: f32[2,1,128], index: 15, kind: input, shape index: {}]
  %s16 = inlined_call_operand.hbm [shape: f32[2,2,128], index: 16, kind: output, shape index: {}]
  %s17 = sld [smem:[#allocation0]]
  $region125: #{tpu_custom_call.1} parent=0
    _
  %s19 = ssub.s32 1, %s17
  %s20 = scalar_select 0, %s19, %s17
  $region1: #{tpu_custom_call.1} parent=0
    #allocation2 [shape = 'u8[16384]{0}', space=vmem, size = 0x4000, scoped, tag = 'input window, operand 0']
    #allocation3 [shape = 's32[2]{0}', space=sflag, size = 0x8, scoped, tag = 'scoped memory for tpu_custom_call.1']
    #allocation4 [shape = 's32[2]{0}', space=sflag, size = 0x8, scoped, tag = 'scoped memory for tpu_custom_call.1']
    #allocation5 [shape = 'u8[131072]{0}', space=vmem, size = 0x20000, scoped, tag = 'input window, operand 2']
    #allocation6 [shape = 's32[2]{0}', space=sflag, size = 0x8, scoped, tag = 'scoped memory for tpu_custom_call.1']
    #allocation7 [shape = 'u8[131072]{0}', space=vmem, size = 0x20000, scoped, tag = 'input window, operand 4']
    #allocation8 [shape = 'u8[131072]{0}', space=vmem, size = 0x20000, scoped, tag = 'input window, operand 6']
    #allocation9 [shape = 's32[2]{0}', space=sflag, size = 0x8, scoped, tag = 'scoped memory for tpu_custom_call.1']
    #allocation10 [shape = 'u8[131072]{0}', space=vmem, size = 0x20000, scoped, tag = 'input window, operand 10']
    #allocation11 [shape = 'u8[131072]{0}', space=vmem, size = 0x20000, scoped, tag = 'input window, operand 12']
    #allocation12 [shape = 's32[2]{0}', space=sflag, size = 0x8, scoped, tag = 'scoped memory for tpu_custom_call.1']
    #allocation13 [shape = 'u8[131072]{0}', space=vmem, size = 0x20000, scoped, tag = 'input window, operand 14']
    #allocation14 [shape = 'u8[2048]{0}', space=vmem, size = 0x800, scoped, tag = 'output window, operand 0']
    %21 = vsyncpa [#allocation3], 0
    %s22 = scalar_lea.sflag [#allocation3], 1
    %23 = vsyncpa %s22, 0
    %24 = vsyncpa [#allocation6], 0
    %s25 = scalar_lea.sflag [#allocation6], 1
    %26 = vsyncpa %s25, 0
    %27 = vsyncpa [#allocation9], 0
    %s28 = scalar_lea.sflag [#allocation9], 1
    %29 = vsyncpa %s28, 0
    %30 = vsyncpa [#allocation12], 0
    %s31 = scalar_lea.sflag [#allocation12], 1
    %32 = vsyncpa %s31, 0
    %33 = vsyncpa [#allocation4], 0
    %s34 = scalar_lea.sflag [#allocation4], 1
    %35 = vsyncpa %s34, 0
    loop: start=0, step=1, limit=4
    $region2: #{tpu_custom_call.1} parent=1 // loop_pre_header
      _
    $region3: #{tpu_custom_call.1} parent=1 // loop_header
      %s37 = sphi 0, %s41
      %p38 = scmp.ge.s32.totalorder %s37, 4
      %s47 = sphi 0, %s49
      %s50 = sphi 0, %s47
      %s51 = sphi 0, %s50
      %s67 = sphi 0, %s51
      %s71 = sphi 0, %s71
      %s73 = sphi 0, %s71
      %s74 = sphi 0, %s73
      %s88 = sphi 0, %s74
      %s94 = sphi 0, %s96
      %s97 = sphi 0, %s94
      %s98 = sphi 0, %s97
      %s114 = sphi 0, %s98
      %s120 = sphi 0, %s122
      %s123 = sphi 0, %s120
      %s124 = sphi 0, %s123
      %s140 = sphi 0, %s124
      %s146 = sphi 0, %s148
      %s149 = sphi 0, %s146
      %s150 = sphi 0, %s149
      %s166 = sphi 0, %s150
      %s172 = sphi 0, %s174
      %s175 = sphi 0, %s172
      %s176 = sphi 0, %s175
      %s192 = sphi 0, %s176
      %s198 = sphi 0, %s200
      %s201 = sphi 0, %s198
      %s202 = sphi 0, %s201
      %s218 = sphi 0, %s202
      %s224 = sphi 0, %s226
      %s227 = sphi 0, %s224
      %s228 = sphi 0, %s227
      %s244 = sphi 0, %s228
      %s250 = sphi 0, %s252
      %s253 = sphi 0, %s250
      %s254 = sphi 0, %s253
      %s270 = sphi 0, %s254
      %s276 = sphi 0, %s278
      %s279 = sphi 0, %s276
      %s280 = sphi 0, %s279
      %s296 = sphi 0, %s280
      %s302 = sphi 0, %s304
      %s305 = sphi 0, %s302
      %s306 = sphi 0, %s305
      %s322 = sphi 0, %s306
      %s328 = sphi 0, %s330
      %s331 = sphi 0, %s328
      %s332 = sphi 0, %s331
      %s348 = sphi 0, %s332
      %s354 = sphi 0, %s356
      %s357 = sphi 0, %s354
      %s358 = sphi 0, %s357
      %s374 = sphi 0, %s358
      %s380 = sphi 0, %s382
      %s383 = sphi 0, %s380
      %s384 = sphi 0, %s383
      %s400 = sphi 0, %s384
      %s406 = sphi 0, %s408
      %s409 = sphi 0, %s406
      %s410 = sphi 0, %s409
      %s426 = sphi 0, %s410
      %s432 = sphi 0, %s434
      %s435 = sphi 0, %s432
      %s436 = sphi 0, %s435
      %s452 = sphi 0, %s436
      %s458 = sphi 0, %s460
      %s461 = sphi 0, %s458
      %s462 = sphi 0, %s461
      %s478 = sphi 0, %s462
    $region4: #{tpu_custom_call.1} parent=1 // loop_header_branch
      %40 = sbr.rel (%p38) target = $region8
    $region5: #{tpu_custom_call.1} parent=1 // loop_body
      %s42 = ssub.s32 %s37, 1
      %s43 = ssub.s32 %s37, 2
      %s44 = sadd.s32 %s37, 1
      %s45 = ssub.s32 %s37, %s44
      %p46 = scmp.eq.s32.totalorder %s45, 0
      %s48 = sadd.s32 %s47, 1
      %s49 = scalar_select %p46, %s47, %s48
      %p52 = pneg %p46
      %p53 = scmp.eq.s32.totalorder %s37, 1
      %p54 = por %p52, %p53
      %p55 = scmp.ne.s32.totalorder %s47, %s50
      %p56 = scmp.eq.s32.totalorder %s37, 0
      %p57 = por %p55, %p56
      %p58 = scmp.ne.s32.totalorder %s47, %s50
      %p59 = scmp.eq.s32.totalorder %s42, 1
      %p60 = por %p58, %p59
      %p61 = scmp.ne.s32.totalorder %s50, %s51
      %p62 = scmp.eq.s32.totalorder %s42, 0
      %p63 = por %p61, %p62
      %p64 = scmp.ne.s32.totalorder %s50, %s51
      %p65 = scmp.eq.s32.totalorder %s43, 1
      %p66 = por %p64, %p65
      %p68 = scmp.ne.s32.totalorder %s51, %s67
      %p69 = scmp.eq.s32.totalorder %s43, 0
      %p70 = por %p68, %p69
      %s72 = sadd.s32 %s71, 1
      %p75 = scmp.eq.s32.totalorder %s37, 1
      %p76 = scmp.ne.s32.totalorder %s71, %s73
      %p77 = scmp.eq.s32.totalorder %s37, 0
      %p78 = por %p76, %p77
      %p79 = scmp.ne.s32.totalorder %s71, %s73
      %p80 = scmp.eq.s32.totalorder %s42, 1
      %p81 = por %p79, %p80
      %p82 = scmp.ne.s32.totalorder %s73, %s74
      %p83 = scmp.eq.s32.totalorder %s42, 0
      %p84 = por %p82, %p83
      %p85 = scmp.ne.s32.totalorder %s73, %s74
      %p86 = scmp.eq.s32.totalorder %s43, 1
      %p87 = por %p85, %p86
      %p89 = scmp.ne.s32.totalorder %s74, %s88
      %p90 = scmp.eq.s32.totalorder %s43, 0
      %p91 = por %p89, %p90
      %s92 = ssub.s32 %s37, %s44
      %p93 = scmp.eq.s32.totalorder %s92, 0
      %s95 = sadd.s32 %s94, 1
      %s96 = scalar_select %p93, %s94, %s95
      %p99 = pneg %p93
      %p100 = scmp.eq.s32.totalorder %s37, 1
      %p101 = por %p99, %p100
      %p102 = scmp.ne.s32.totalorder %s94, %s97
      %p103 = scmp.eq.s32.totalorder %s37, 0
      %p104 = por %p102, %p103
      %p105 = scmp.ne.s32.totalorder %s94, %s97
      %p106 = scmp.eq.s32.totalorder %s42, 1
      %p107 = por %p105, %p106
      %p108 = scmp.ne.s32.totalorder %s97, %s98
      %p109 = scmp.eq.s32.totalorder %s42, 0
      %p110 = por %p108, %p109
      %p111 = scmp.ne.s32.totalorder %s97, %s98
      %p112 = scmp.eq.s32.totalorder %s43, 1
      %p113 = por %p111, %p112
      %p115 = scmp.ne.s32.totalorder %s98, %s114
      %p116 = scmp.eq.s32.totalorder %s43, 0
      %p117 = por %p115, %p116
      %s118 = ssub.s32 %s37, %s44
      %p119 = scmp.eq.s32.totalorder %s118, 0
      %s121 = sadd.s32 %s120, 1
      %s122 = scalar_select %p119, %s120, %s121
      %p125 = pneg %p119
      %p126 = scmp.eq.s32.totalorder %s37, 1
      %p127 = por %p125, %p126
      %p128 = scmp.ne.s32.totalorder %s120, %s123
      %p129 = scmp.eq.s32.totalorder %s37, 0
      %p130 = por %p128, %p129
      %p131 = scmp.ne.s32.totalorder %s120, %s123
      %p132 = scmp.eq.s32.totalorder %s42, 1
      %p133 = por %p131, %p132
      %p134 = scmp.ne.s32.totalorder %s123, %s124
      %p135 = scmp.eq.s32.totalorder %s42, 0
      %p136 = por %p134, %p135
      %p137 = scmp.ne.s32.totalorder %s123, %s124
      %p138 = scmp.eq.s32.totalorder %s43, 1
      %p139 = por %p137, %p138
      %p141 = scmp.ne.s32.totalorder %s124, %s140
      %p142 = scmp.eq.s32.totalorder %s43, 0
      %p143 = por %p141, %p142
      %s144 = ssub.s32 %s37, %s44
      %p145 = scmp.eq.s32.totalorder %s144, 0
      %s147 = sadd.s32 %s146, 1
      %s148 = scalar_select %p145, %s146, %s147
      %p151 = pneg %p145
      %p152 = scmp.eq.s32.totalorder %s37, 1
      %p153 = por %p151, %p152
      %p154 = scmp.ne.s32.totalorder %s146, %s149
      %p155 = scmp.eq.s32.totalorder %s37, 0
      %p156 = por %p154, %p155
      %p157 = scmp.ne.s32.totalorder %s146, %s149
      %p158 = scmp.eq.s32.totalorder %s42, 1
      %p159 = por %p157, %p158
      %p160 = scmp.ne.s32.totalorder %s149, %s150
      %p161 = scmp.eq.s32.totalorder %s42, 0
      %p162 = por %p160, %p161
      %p163 = scmp.ne.s32.totalorder %s149, %s150
      %p164 = scmp.eq.s32.totalorder %s43, 1
      %p165 = por %p163, %p164
      %p167 = scmp.ne.s32.totalorder %s150, %s166
      %p168 = scmp.eq.s32.totalorder %s43, 0
      %p169 = por %p167, %p168
      %s170 = ssub.s32 %s37, %s44
      %p171 = scmp.eq.s32.totalorder %s170, 0
      %s173 = sadd.s32 %s172, 1
      %s174 = scalar_select %p171, %s172, %s173
      %p177 = pneg %p171
      %p178 = scmp.eq.s32.totalorder %s37, 1
      %p179 = por %p177, %p178
      %p180 = scmp.ne.s32.totalorder %s172, %s175
      %p181 = scmp.eq.s32.totalorder %s37, 0
      %p182 = por %p180, %p181
      %p183 = scmp.ne.s32.totalorder %s172, %s175
      %p184 = scmp.eq.s32.totalorder %s42, 1
      %p185 = por %p183, %p184
      %p186 = scmp.ne.s32.totalorder %s175, %s176
      %p187 = scmp.eq.s32.totalorder %s42, 0
      %p188 = por %p186, %p187
      %p189 = scmp.ne.s32.totalorder %s175, %s176
      %p190 = scmp.eq.s32.totalorder %s43, 1
      %p191 = por %p189, %p190
      %p193 = scmp.ne.s32.totalorder %s176, %s192
      %p194 = scmp.eq.s32.totalorder %s43, 0
      %p195 = por %p193, %p194
      %s196 = ssub.s32 %s37, %s44
      %p197 = scmp.eq.s32.totalorder %s196, 0
      %s199 = sadd.s32 %s198, 1
      %s200 = scalar_select %p197, %s198, %s199
      %p203 = pneg %p197
      %p204 = scmp.eq.s32.totalorder %s37, 1
      %p205 = por %p203, %p204
      %p206 = scmp.ne.s32.totalorder %s198, %s201
      %p207 = scmp.eq.s32.totalorder %s37, 0
      %p208 = por %p206, %p207
      %p209 = scmp.ne.s32.totalorder %s198, %s201
      %p210 = scmp.eq.s32.totalorder %s42, 1
      %p211 = por %p209, %p210
      %p212 = scmp.ne.s32.totalorder %s201, %s202
      %p213 = scmp.eq.s32.totalorder %s42, 0
      %p214 = por %p212, %p213
      %p215 = scmp.ne.s32.totalorder %s201, %s202
      %p216 = scmp.eq.s32.totalorder %s43, 1
      %p217 = por %p215, %p216
      %p219 = scmp.ne.s32.totalorder %s202, %s218
      %p220 = scmp.eq.s32.totalorder %s43, 0
      %p221 = por %p219, %p220
      %s222 = ssub.s32 %s37, %s44
      %p223 = scmp.eq.s32.totalorder %s222, 0
      %s225 = sadd.s32 %s224, 1
      %s226 = scalar_select %p223, %s224, %s225
      %p229 = pneg %p223
      %p230 = scmp.eq.s32.totalorder %s37, 1
      %p231 = por %p229, %p230
      %p232 = scmp.ne.s32.totalorder %s224, %s227
      %p233 = scmp.eq.s32.totalorder %s37, 0
      %p234 = por %p232, %p233
      %p235 = scmp.ne.s32.totalorder %s224, %s227
      %p236 = scmp.eq.s32.totalorder %s42, 1
      %p237 = por %p235, %p236
      %p238 = scmp.ne.s32.totalorder %s227, %s228
      %p239 = scmp.eq.s32.totalorder %s42, 0
      %p240 = por %p238, %p239
      %p241 = scmp.ne.s32.totalorder %s227, %s228
      %p242 = scmp.eq.s32.totalorder %s43, 1
      %p243 = por %p241, %p242
      %p245 = scmp.ne.s32.totalorder %s228, %s244
      %p246 = scmp.eq.s32.totalorder %s43, 0
      %p247 = por %p245, %p246
      %s248 = ssub.s32 %s37, %s44
      %p249 = scmp.eq.s32.totalorder %s248, 0
      %s251 = sadd.s32 %s250, 1
      %s252 = scalar_select %p249, %s250, %s251
      %p255 = pneg %p249
      %p256 = scmp.eq.s32.totalorder %s37, 1
      %p257 = por %p255, %p256
      %p258 = scmp.ne.s32.totalorder %s250, %s253
      %p259 = scmp.eq.s32.totalorder %s37, 0
      %p260 = por %p258, %p259
      %p261 = scmp.ne.s32.totalorder %s250, %s253
      %p262 = scmp.eq.s32.totalorder %s42, 1
      %p263 = por %p261, %p262
      %p264 = scmp.ne.s32.totalorder %s253, %s254
      %p265 = scmp.eq.s32.totalorder %s42, 0
      %p266 = por %p264, %p265
      %p267 = scmp.ne.s32.totalorder %s253, %s254
      %p268 = scmp.eq.s32.totalorder %s43, 1
      %p269 = por %p267, %p268
      %p271 = scmp.ne.s32.totalorder %s254, %s270
      %p272 = scmp.eq.s32.totalorder %s43, 0
      %p273 = por %p271, %p272
      %s274 = ssub.s32 %s37, %s44
      %p275 = scmp.eq.s32.totalorder %s274, 0
      %s277 = sadd.s32 %s276, 1
      %s278 = scalar_select %p275, %s276, %s277
      %p281 = pneg %p275
      %p282 = scmp.eq.s32.totalorder %s37, 1
      %p283 = por %p281, %p282
      %p284 = scmp.ne.s32.totalorder %s276, %s279
      %p285 = scmp.eq.s32.totalorder %s37, 0
      %p286 = por %p284, %p285
      %p287 = scmp.ne.s32.totalorder %s276, %s279
      %p288 = scmp.eq.s32.totalorder %s42, 1
      %p289 = por %p287, %p288
      %p290 = scmp.ne.s32.totalorder %s279, %s280
      %p291 = scmp.eq.s32.totalorder %s42, 0
      %p292 = por %p290, %p291
      %p293 = scmp.ne.s32.totalorder %s279, %s280
      %p294 = scmp.eq.s32.totalorder %s43, 1
      %p295 = por %p293, %p294
      %p297 = scmp.ne.s32.totalorder %s280, %s296
      %p298 = scmp.eq.s32.totalorder %s43, 0
      %p299 = por %p297, %p298
      %s300 = ssub.s32 %s37, %s44
      %p301 = scmp.eq.s32.totalorder %s300, 0
      %s303 = sadd.s32 %s302, 1
      %s304 = scalar_select %p301, %s302, %s303
      %p307 = pneg %p301
      %p308 = scmp.eq.s32.totalorder %s37, 1
      %p309 = por %p307, %p308
      %p310 = scmp.ne.s32.totalorder %s302, %s305
      %p311 = scmp.eq.s32.totalorder %s37, 0
      %p312 = por %p310, %p311
      %p313 = scmp.ne.s32.totalorder %s302, %s305
      %p314 = scmp.eq.s32.totalorder %s42, 1
      %p315 = por %p313, %p314
      %p316 = scmp.ne.s32.totalorder %s305, %s306
      %p317 = scmp.eq.s32.totalorder %s42, 0
      %p318 = por %p316, %p317
      %p319 = scmp.ne.s32.totalorder %s305, %s306
      %p320 = scmp.eq.s32.totalorder %s43, 1
      %p321 = por %p319, %p320
      %p323 = scmp.ne.s32.totalorder %s306, %s322
      %p324 = scmp.eq.s32.totalorder %s43, 0
      %p325 = por %p323, %p324
      %s326 = ssub.s32 %s37, %s44
      %p327 = scmp.eq.s32.totalorder %s326, 0
      %s329 = sadd.s32 %s328, 1
      %s330 = scalar_select %p327, %s328, %s329
      %p333 = pneg %p327
      %p334 = scmp.eq.s32.totalorder %s37, 1
      %p335 = por %p333, %p334
      %p336 = scmp.ne.s32.totalorder %s328, %s331
      %p337 = scmp.eq.s32.totalorder %s37, 0
      %p338 = por %p336, %p337
      %p339 = scmp.ne.s32.totalorder %s328, %s331
      %p340 = scmp.eq.s32.totalorder %s42, 1
      %p341 = por %p339, %p340
      %p342 = scmp.ne.s32.totalorder %s331, %s332
      %p343 = scmp.eq.s32.totalorder %s42, 0
      %p344 = por %p342, %p343
      %p345 = scmp.ne.s32.totalorder %s331, %s332
      %p346 = scmp.eq.s32.totalorder %s43, 1
      %p347 = por %p345, %p346
      %p349 = scmp.ne.s32.totalorder %s332, %s348
      %p350 = scmp.eq.s32.totalorder %s43, 0
      %p351 = por %p349, %p350
      %s352 = ssub.s32 %s37, %s44
      %p353 = scmp.eq.s32.totalorder %s352, 0
      %s355 = sadd.s32 %s354, 1
      %s356 = scalar_select %p353, %s354, %s355
      %p359 = pneg %p353
      %p360 = scmp.eq.s32.totalorder %s37, 1
      %p361 = por %p359, %p360
      %p362 = scmp.ne.s32.totalorder %s354, %s357
      %p363 = scmp.eq.s32.totalorder %s37, 0
      %p364 = por %p362, %p363
      %p365 = scmp.ne.s32.totalorder %s354, %s357
      %p366 = scmp.eq.s32.totalorder %s42, 1
      %p367 = por %p365, %p366
      %p368 = scmp.ne.s32.totalorder %s357, %s358
      %p369 = scmp.eq.s32.totalorder %s42, 0
      %p370 = por %p368, %p369
      %p371 = scmp.ne.s32.totalorder %s357, %s358
      %p372 = scmp.eq.s32.totalorder %s43, 1
      %p373 = por %p371, %p372
      %p375 = scmp.ne.s32.totalorder %s358, %s374
      %p376 = scmp.eq.s32.totalorder %s43, 0
      %p377 = por %p375, %p376
      %s378 = ssub.s32 %s37, %s44
      %p379 = scmp.eq.s32.totalorder %s378, 0
      %s381 = sadd.s32 %s380, 1
      %s382 = scalar_select %p379, %s380, %s381
      %p385 = pneg %p379
      %p386 = scmp.eq.s32.totalorder %s37, 1
      %p387 = por %p385, %p386
      %p388 = scmp.ne.s32.totalorder %s380, %s383
      %p389 = scmp.eq.s32.totalorder %s37, 0
      %p390 = por %p388, %p389
      %p391 = scmp.ne.s32.totalorder %s380, %s383
      %p392 = scmp.eq.s32.totalorder %s42, 1
      %p393 = por %p391, %p392
      %p394 = scmp.ne.s32.totalorder %s383, %s384
      %p395 = scmp.eq.s32.totalorder %s42, 0
      %p396 = por %p394, %p395
      %p397 = scmp.ne.s32.totalorder %s383, %s384
      %p398 = scmp.eq.s32.totalorder %s43, 1
      %p399 = por %p397, %p398
      %p401 = scmp.ne.s32.totalorder %s384, %s400
      %p402 = scmp.eq.s32.totalorder %s43, 0
      %p403 = por %p401, %p402
      %s404 = ssub.s32 %s37, %s44
      %p405 = scmp.eq.s32.totalorder %s404, 0
      %s407 = sadd.s32 %s406, 1
      %s408 = scalar_select %p405, %s406, %s407
      %p411 = pneg %p405
      %p412 = scmp.eq.s32.totalorder %s37, 1
      %p413 = por %p411, %p412
      %p414 = scmp.ne.s32.totalorder %s406, %s409
      %p415 = scmp.eq.s32.totalorder %s37, 0
      %p416 = por %p414, %p415
      %p417 = scmp.ne.s32.totalorder %s406, %s409
      %p418 = scmp.eq.s32.totalorder %s42, 1
      %p419 = por %p417, %p418
      %p420 = scmp.ne.s32.totalorder %s409, %s410
      %p421 = scmp.eq.s32.totalorder %s42, 0
      %p422 = por %p420, %p421
      %p423 = scmp.ne.s32.totalorder %s409, %s410
      %p424 = scmp.eq.s32.totalorder %s43, 1
      %p425 = por %p423, %p424
      %p427 = scmp.ne.s32.totalorder %s410, %s426
      %p428 = scmp.eq.s32.totalorder %s43, 0
      %p429 = por %p427, %p428
      %s430 = ssub.s32 %s37, %s44
      %p431 = scmp.eq.s32.totalorder %s430, 0
      %s433 = sadd.s32 %s432, 1
      %s434 = scalar_select %p431, %s432, %s433
      %p437 = pneg %p431
      %p438 = scmp.eq.s32.totalorder %s37, 1
      %p439 = por %p437, %p438
      %p440 = scmp.ne.s32.totalorder %s432, %s435
      %p441 = scmp.eq.s32.totalorder %s37, 0
      %p442 = por %p440, %p441
      %p443 = scmp.ne.s32.totalorder %s432, %s435
      %p444 = scmp.eq.s32.totalorder %s42, 1
      %p445 = por %p443, %p444
      %p446 = scmp.ne.s32.totalorder %s435, %s436
      %p447 = scmp.eq.s32.totalorder %s42, 0
      %p448 = por %p446, %p447
      %p449 = scmp.ne.s32.totalorder %s435, %s436
      %p450 = scmp.eq.s32.totalorder %s43, 1
      %p451 = por %p449, %p450
      %p453 = scmp.ne.s32.totalorder %s436, %s452
      %p454 = scmp.eq.s32.totalorder %s43, 0
      %p455 = por %p453, %p454
      %s456 = ssub.s32 %s37, %s44
      %p457 = scmp.eq.s32.totalorder %s456, 0
      %s459 = sadd.s32 %s458, 1
      %s460 = scalar_select %p457, %s458, %s459
      %p463 = pneg %p457
      %p464 = scmp.eq.s32.totalorder %s37, 1
      %p465 = por %p463, %p464
      %p466 = scmp.ne.s32.totalorder %s458, %s461
      %p467 = scmp.eq.s32.totalorder %s37, 0
      %p468 = por %p466, %p467
      %p469 = scmp.ne.s32.totalorder %s458, %s461
      %p470 = scmp.eq.s32.totalorder %s42, 1
      %p471 = por %p469, %p470
      %p472 = scmp.ne.s32.totalorder %s461, %s462
      %p473 = scmp.eq.s32.totalorder %s42, 0
      %p474 = por %p472, %p473
      %p475 = scmp.ne.s32.totalorder %s461, %s462
      %p476 = scmp.eq.s32.totalorder %s43, 1
      %p477 = por %p475, %p476
      %p479 = scmp.ne.s32.totalorder %s462, %s478
      %p480 = scmp.eq.s32.totalorder %s43, 0
      %p481 = por %p479, %p480
      %p482 = scmp.le.s32.totalorder 1, %s37
      %p483 = scmp.lt.s32.totalorder %s37, 3
      %p484 = pnand %p482, %p483
      %p485 = pneg %p484
      // Predicated region
      $region9: #{tpu_custom_call.1} parent=5 // pred_check
        _
      $region10: #{tpu_custom_call.1} parent=5 // pred_check_branch
        %487 = sbr.rel (%p484) target = $region12
      $region11: #{tpu_custom_call.1} parent=5 // pred_region
        %s488 = ssub.s32 %s37, 1
        // Predicated region
        $region13: #{tpu_custom_call.1} parent=11 // pred_check
          %p489 = pneg %p84
        $region14: #{tpu_custom_call.1} parent=11 // pred_check_branch
          %491 = sbr.rel (%p489) target = $region16
        $region15: #{tpu_custom_call.1} parent=11 // pred_region
          _
        $region16: #{tpu_custom_call.1} parent=11 // pred_fallthru
          _
      $region12: #{tpu_custom_call.1} parent=5 // pred_fallthru
        _
      %p492 = scmp.lt.s32.totalorder %s37, 2
      // Predicated region
      $region17: #{tpu_custom_call.1} parent=5 // pred_check
        %p493 = pneg %p492
      $region18: #{tpu_custom_call.1} parent=5 // pred_check_branch
        %495 = sbr.rel (%p493) target = $region20
      $region19: #{tpu_custom_call.1} parent=5 // pred_region
        // Predicated region
        $region21: #{tpu_custom_call.1} parent=19 // pred_check
          %p496 = pneg %p57
        $region22: #{tpu_custom_call.1} parent=19 // pred_check_branch
          %498 = sbr.rel (%p496) target = $region24
        $region23: #{tpu_custom_call.1} parent=19 // pred_region
          %s499 = sand.u32 %s47, 1
          %s500 = scalar_lea.sflag [#allocation3], %s499
          %s501 = sand.u32 %s47, 1
          %s502 = smul.addr %s501, 16
          %s503 = scalar_lea.vmem [#allocation2], %s502
          %s505 = ssub.s32 256, 256
          %506 = vsyncadd %s500, %s505
          %s507 = smul.addr %s37, 2
          %s508 = smul.addr %s507, 128
          %s509 = scalar_lea.hbm %s0, %s508
          %s510 = sshll.u32 %s503, 4
          %s511 = int_to_ptr.vmem [resolvable:$true] %s510
          %516 = dma.hbm_to_vmem [thread:$0]  %s509, 256, %s511, %s500, 128, 128, 8
        $region24: #{tpu_custom_call.1} parent=19 // pred_fallthru
          _
        // Predicated region
        $region25: #{tpu_custom_call.1} parent=19 // pred_check
          %p517 = pneg %p104
        $region26: #{tpu_custom_call.1} parent=19 // pred_check_branch
          %519 = sbr.rel (%p517) target = $region28
        $region27: #{tpu_custom_call.1} parent=19 // pred_region
          %s520 = sand.u32 %s37, 1
          %s521 = scalar_lea.sflag [#allocation6], %s520
          %s522 = sand.u32 %s94, 1
          %s523 = smul.addr %s522, 128
          %s524 = scalar_lea.vmem [#allocation5], %s523
          %s526 = ssub.s32 2048, 2048
          %527 = vsyncadd %s521, %s526
          %s528 = smul.addr %s37, 16
          %s529 = smul.addr %s528, 128
          %s530 = scalar_lea.hbm %s2, %s529
          %s531 = sshll.u32 %s524, 4
          %s532 = int_to_ptr.vmem [resolvable:$true] %s531
          %537 = dma.hbm_to_vmem [thread:$0]  %s530, 2048, %s532, %s521, 128, 128, 8
        $region28: #{tpu_custom_call.1} parent=19 // pred_fallthru
          _
        // Predicated region
        $region29: #{tpu_custom_call.1} parent=19 // pred_check
          %p538 = pneg %p130
        $region30: #{tpu_custom_call.1} parent=19 // pred_check_branch
          %540 = sbr.rel (%p538) target = $region32
        $region31: #{tpu_custom_call.1} parent=19 // pred_region
          %p541 = scmp.lt.s32.totalorder %s37, 1
          %s542 = scalar_select %p541, %s37, 1
          %s543 = scalar_lea.vmem %s3, %s542
        $region32: #{tpu_custom_call.1} parent=19 // pred_fallthru
          _
        // Predicated region
        $region33: #{tpu_custom_call.1} parent=19 // pred_check
          %p544 = pneg %p156
        $region34: #{tpu_custom_call.1} parent=19 // pred_check_branch
          %546 = sbr.rel (%p544) target = $region36
        $region35: #{tpu_custom_call.1} parent=19 // pred_region
          %s547 = sand.u32 %s37, 1
          %s548 = scalar_lea.sflag [#allocation6], %s547
          %s549 = sand.u32 %s146, 1
          %s550 = smul.addr %s549, 128
          %s551 = scalar_lea.vmem [#allocation7], %s550
          %s553 = ssub.s32 2048, 2048
          %554 = vsyncadd %s548, %s553
          %s555 = smul.addr %s37, 16
          %s556 = smul.addr %s555, 128
          %s557 = scalar_lea.hbm %s4, %s556
          %s558 = sshll.u32 %s551, 4
          %s559 = int_to_ptr.vmem [resolvable:$true] %s558
          %564 = dma.hbm_to_vmem [thread:$0]  %s557, 2048, %s559, %s548, 128, 128, 8
        $region36: #{tpu_custom_call.1} parent=19 // pred_fallthru
          _
        // Predicated region
        $region37: #{tpu_custom_call.1} parent=19 // pred_check
          %p565 = pneg %p182
        $region38: #{tpu_custom_call.1} parent=19 // pred_check_branch
          %567 = sbr.rel (%p565) target = $region40
        $region39: #{tpu_custom_call.1} parent=19 // pred_region
          %p568 = scmp.lt.s32.totalorder %s37, 1
          %s569 = scalar_select %p568, %s37, 1
          %s570 = scalar_lea.vmem %s5, %s569
        $region40: #{tpu_custom_call.1} parent=19 // pred_fallthru
          _
        // Predicated region
        $region41: #{tpu_custom_call.1} parent=19 // pred_check
          %p571 = pneg %p208
        $region42: #{tpu_custom_call.1} parent=19 // pred_check_branch
          %573 = sbr.rel (%p571) target = $region44
        $region43: #{tpu_custom_call.1} parent=19 // pred_region
          %s574 = sand.u32 %s37, 1
          %s575 = scalar_lea.sflag [#allocation9], %s574
          %s576 = sand.u32 %s198, 1
          %s577 = smul.addr %s576, 128
          %s578 = scalar_lea.vmem [#allocation8], %s577
          %s580 = ssub.s32 2048, 2048
          %581 = vsyncadd %s575, %s580
          %s582 = smul.addr %s37, 16
          %s583 = smul.addr %s582, 128
          %s584 = scalar_lea.hbm %s6, %s583
          %s585 = sshll.u32 %s578, 4
          %s586 = int_to_ptr.vmem [resolvable:$true] %s585
          %591 = dma.hbm_to_vmem [thread:$0]  %s584, 2048, %s586, %s575, 128, 128, 8
        $region44: #{tpu_custom_call.1} parent=19 // pred_fallthru
          _
        // Predicated region
        $region45: #{tpu_custom_call.1} parent=19 // pred_check
          %p592 = pneg %p234
        $region46: #{tpu_custom_call.1} parent=19 // pred_check_branch
          %594 = sbr.rel (%p592) target = $region48
        $region47: #{tpu_custom_call.1} parent=19 // pred_region
          %p595 = scmp.lt.s32.totalorder %s37, 1
          %s596 = scalar_select %p595, %s37, 1
          %s597 = scalar_lea.vmem %s7, %s596
        $region48: #{tpu_custom_call.1} parent=19 // pred_fallthru
          _
        // Predicated region
        $region49: #{tpu_custom_call.1} parent=19 // pred_check
          %p598 = pneg %p260
        $region50: #{tpu_custom_call.1} parent=19 // pred_check_branch
          %600 = sbr.rel (%p598) target = $region52
        $region51: #{tpu_custom_call.1} parent=19 // pred_region
          %p601 = scmp.lt.s32.totalorder %s37, 1
          %s602 = scalar_select %p601, %s37, 1
          %s603 = scalar_lea.vmem %s8, %s602
        $region52: #{tpu_custom_call.1} parent=19 // pred_fallthru
          _
        // Predicated region
        $region53: #{tpu_custom_call.1} parent=19 // pred_check
          %p604 = pneg %p286
        $region54: #{tpu_custom_call.1} parent=19 // pred_check_branch
          %606 = sbr.rel (%p604) target = $region56
        $region55: #{tpu_custom_call.1} parent=19 // pred_region
          %p607 = scmp.lt.s32.totalorder %s37, 1
          %s608 = scalar_select %p607, %s37, 1
          %s609 = scalar_lea.vmem %s9, %s608
        $region56: #{tpu_custom_call.1} parent=19 // pred_fallthru
          _
        // Predicated region
        $region57: #{tpu_custom_call.1} parent=19 // pred_check
          %p610 = pneg %p312
        $region58: #{tpu_custom_call.1} parent=19 // pred_check_branch
          %612 = sbr.rel (%p610) target = $region60
        $region59: #{tpu_custom_call.1} parent=19 // pred_region
          %s613 = sand.u32 %s37, 1
          %s614 = scalar_lea.sflag [#allocation9], %s613
          %s615 = sand.u32 %s302, 1
          %s616 = smul.addr %s615, 128
          %s617 = scalar_lea.vmem [#allocation10], %s616
          %s619 = ssub.s32 2048, 2048
          %620 = vsyncadd %s614, %s619
          %s621 = smul.addr %s37, 16
          %s622 = smul.addr %s621, 128
          %s623 = scalar_lea.hbm %s10, %s622
          %s624 = sshll.u32 %s617, 4
          %s625 = int_to_ptr.vmem [resolvable:$true] %s624
          %630 = dma.hbm_to_vmem [thread:$0]  %s623, 2048, %s625, %s614, 128, 128, 8
        $region60: #{tpu_custom_call.1} parent=19 // pred_fallthru
          _
        // Predicated region
        $region61: #{tpu_custom_call.1} parent=19 // pred_check
          %p631 = pneg %p338
        $region62: #{tpu_custom_call.1} parent=19 // pred_check_branch
          %633 = sbr.rel (%p631) target = $region64
        $region63: #{tpu_custom_call.1} parent=19 // pred_region
          %p634 = scmp.lt.s32.totalorder %s37, 1
          %s635 = scalar_select %p634, %s37, 1
          %s636 = scalar_lea.vmem %s11, %s635
        $region64: #{tpu_custom_call.1} parent=19 // pred_fallthru
          _
        // Predicated region
        $region65: #{tpu_custom_call.1} parent=19 // pred_check
          %p637 = pneg %p364
        $region66: #{tpu_custom_call.1} parent=19 // pred_check_branch
          %639 = sbr.rel (%p637) target = $region68
        $region67: #{tpu_custom_call.1} parent=19 // pred_region
          %s640 = sand.u32 %s37, 1
          %s641 = scalar_lea.sflag [#allocation12], %s640
          %s642 = sand.u32 %s354, 1
          %s643 = smul.addr %s642, 128
          %s644 = scalar_lea.vmem [#allocation11], %s643
          %s646 = ssub.s32 2048, 2048
          %647 = vsyncadd %s641, %s646
          %s648 = smul.addr %s37, 16
          %s649 = smul.addr %s648, 128
          %s650 = scalar_lea.hbm %s12, %s649
          %s651 = sshll.u32 %s644, 4
          %s652 = int_to_ptr.vmem [resolvable:$true] %s651
          %657 = dma.hbm_to_vmem [thread:$0]  %s650, 2048, %s652, %s641, 128, 128, 8
        $region68: #{tpu_custom_call.1} parent=19 // pred_fallthru
          _
        // Predicated region
        $region69: #{tpu_custom_call.1} parent=19 // pred_check
          %p658 = pneg %p390
        $region70: #{tpu_custom_call.1} parent=19 // pred_check_branch
          %660 = sbr.rel (%p658) target = $region72
        $region71: #{tpu_custom_call.1} parent=19 // pred_region
          %p661 = scmp.lt.s32.totalorder %s37, 1
          %s662 = scalar_select %p661, %s37, 1
          %s663 = scalar_lea.vmem %s13, %s662
        $region72: #{tpu_custom_call.1} parent=19 // pred_fallthru
          _
        // Predicated region
        $region73: #{tpu_custom_call.1} parent=19 // pred_check
          %p664 = pneg %p416
        $region74: #{tpu_custom_call.1} parent=19 // pred_check_branch
          %666 = sbr.rel (%p664) target = $region76
        $region75: #{tpu_custom_call.1} parent=19 // pred_region
          %s667 = sand.u32 %s37, 1
          %s668 = scalar_lea.sflag [#allocation12], %s667
          %s669 = sand.u32 %s406, 1
          %s670 = smul.addr %s669, 128
          %s671 = scalar_lea.vmem [#allocation13], %s670
          %s673 = ssub.s32 2048, 2048
          %674 = vsyncadd %s668, %s673
          %s675 = smul.addr %s37, 16
          %s676 = smul.addr %s675, 128
          %s677 = scalar_lea.hbm %s14, %s676
          %s678 = sshll.u32 %s671, 4
          %s679 = int_to_ptr.vmem [resolvable:$true] %s678
          %684 = dma.hbm_to_vmem [thread:$0]  %s677, 2048, %s679, %s668, 128, 128, 8
        $region76: #{tpu_custom_call.1} parent=19 // pred_fallthru
          _
        // Predicated region
        $region77: #{tpu_custom_call.1} parent=19 // pred_check
          %p685 = pneg %p442
        $region78: #{tpu_custom_call.1} parent=19 // pred_check_branch
          %687 = sbr.rel (%p685) target = $region80
        $region79: #{tpu_custom_call.1} parent=19 // pred_region
          %p688 = scmp.lt.s32.totalorder %s37, 1
          %s689 = scalar_select %p688, %s37, 1
          %s690 = scalar_lea.vmem %s15, %s689
        $region80: #{tpu_custom_call.1} parent=19 // pred_fallthru
          _
      $region20: #{tpu_custom_call.1} parent=5 // pred_fallthru
        _
      %p691 = scmp.le.s32.totalorder 1, %s37
      %p692 = scmp.lt.s32.totalorder %s37, 3
      %p693 = pnand %p691, %p692
      %p694 = pneg %p693
      // Predicated region
      $region81: #{tpu_custom_call.1} parent=5 // pred_check
        _
      $region82: #{tpu_custom_call.1} parent=5 // pred_check_branch
        %696 = sbr.rel (%p693) target = $region84
      $region83: #{tpu_custom_call.1} parent=5 // pred_region
        %s697 = ssub.s32 %s37, 1
        %s698 = sand.u32 %s50, 1
        %s699 = scalar_lea.sflag [#allocation3], %s698
        %s700 = sand.u32 %s50, 1
        %s701 = smul.addr %s700, 16
        %s702 = scalar_lea.vmem [#allocation2], %s701
        // Predicated region
        $region85: #{tpu_custom_call.1} parent=83 // pred_check
          %p703 = pneg %p63
        $region86: #{tpu_custom_call.1} parent=83 // pred_check_branch
          %705 = sbr.rel (%p703) target = $region88
        $region87: #{tpu_custom_call.1} parent=83 // pred_region
          %706 = dma.done %s699, 256
        $region88: #{tpu_custom_call.1} parent=83 // pred_fallthru
          _
        %s707 = sand.u32 %s42, 1
        %s708 = scalar_lea.sflag [#allocation6], %s707
        %s709 = sand.u32 %s97, 1
        %s710 = smul.addr %s709, 128
        %s711 = scalar_lea.vmem [#allocation5], %s710
        // Predicated region
        $region89: #{tpu_custom_call.1} parent=83 // pred_check
          %p712 = pneg %p110
        $region90: #{tpu_custom_call.1} parent=83 // pred_check_branch
          %714 = sbr.rel (%p712) target = $region92
        $region91: #{tpu_custom_call.1} parent=83 // pred_region
          %715 = dma.done %s708, 2048
        $region92: #{tpu_custom_call.1} parent=83 // pred_fallthru
          _
        %s716 = sand.u32 %s42, 1
        %s717 = scalar_lea.sflag [#allocation6], %s716
        %s718 = sand.u32 %s149, 1
        %s719 = smul.addr %s718, 128
        %s720 = scalar_lea.vmem [#allocation7], %s719
        // Predicated region
        $region93: #{tpu_custom_call.1} parent=83 // pred_check
          %p721 = pneg %p162
        $region94: #{tpu_custom_call.1} parent=83 // pred_check_branch
          %723 = sbr.rel (%p721) target = $region96
        $region95: #{tpu_custom_call.1} parent=83 // pred_region
          %724 = dma.done %s717, 2048
        $region96: #{tpu_custom_call.1} parent=83 // pred_fallthru
          _
        %s725 = sand.u32 %s42, 1
        %s726 = scalar_lea.sflag [#allocation9], %s725
        %s727 = sand.u32 %s201, 1
        %s728 = smul.addr %s727, 128
        %s729 = scalar_lea.vmem [#allocation8], %s728
        // Predicated region
        $region97: #{tpu_custom_call.1} parent=83 // pred_check
          %p730 = pneg %p214
        $region98: #{tpu_custom_call.1} parent=83 // pred_check_branch
          %732 = sbr.rel (%p730) target = $region100
        $region99: #{tpu_custom_call.1} parent=83 // pred_region
          %733 = dma.done %s726, 2048
        $region100: #{tpu_custom_call.1} parent=83 // pred_fallthru
          _
        %s734 = sand.u32 %s42, 1
        %s735 = scalar_lea.sflag [#allocation9], %s734
        %s736 = sand.u32 %s305, 1
        %s737 = smul.addr %s736, 128
        %s738 = scalar_lea.vmem [#allocation10], %s737
        // Predicated region
        $region101: #{tpu_custom_call.1} parent=83 // pred_check
          %p739 = pneg %p318
        $region102: #{tpu_custom_call.1} parent=83 // pred_check_branch
          %741 = sbr.rel (%p739) target = $region104
        $region103: #{tpu_custom_call.1} parent=83 // pred_region
          %742 = dma.done %s735, 2048
        $region104: #{tpu_custom_call.1} parent=83 // pred_fallthru
          _
        %s743 = sand.u32 %s42, 1
        %s744 = scalar_lea.sflag [#allocation12], %s743
        %s745 = sand.u32 %s357, 1
        %s746 = smul.addr %s745, 128
        %s747 = scalar_lea.vmem [#allocation11], %s746
        // Predicated region
        $region105: #{tpu_custom_call.1} parent=83 // pred_check
          %p748 = pneg %p370
        $region106: #{tpu_custom_call.1} parent=83 // pred_check_branch
          %750 = sbr.rel (%p748) target = $region108
        $region107: #{tpu_custom_call.1} parent=83 // pred_region
          %751 = dma.done %s744, 2048
        $region108: #{tpu_custom_call.1} parent=83 // pred_fallthru
          _
        %s752 = sand.u32 %s42, 1
        %s753 = scalar_lea.sflag [#allocation12], %s752
        %s754 = sand.u32 %s409, 1
        %s755 = smul.addr %s754, 128
        %s756 = scalar_lea.vmem [#allocation13], %s755
        // Predicated region
        $region109: #{tpu_custom_call.1} parent=83 // pred_check
          %p757 = pneg %p422
        $region110: #{tpu_custom_call.1} parent=83 // pred_check_branch
          %759 = sbr.rel (%p757) target = $region112
        $region111: #{tpu_custom_call.1} parent=83 // pred_region
          %760 = dma.done %s753, 2048
        $region112: #{tpu_custom_call.1} parent=83 // pred_fallthru
          _
        %s761 = sand.u32 %s50, 1
        %s762 = scalar_lea.sflag [#allocation3], %s761
        %s763 = sand.u32 %s50, 1
        %s764 = smul.addr %s763, 16
        %s765 = scalar_lea.vmem [#allocation2], %s764
        %p766 = pneg %p63
        %p767 = pneg %p60
        %p768 = pneg %p84
        %p769 = pneg %p81
        %s770 = sand.u32 %s42, 1
        %s771 = scalar_lea.sflag [#allocation6], %s770
        %s772 = sand.u32 %s97, 1
        %s773 = smul.addr %s772, 128
        %s774 = scalar_lea.vmem [#allocation5], %s773
        %p775 = pneg %p110
        %p776 = pneg %p107
        %p777 = scmp.lt.s32.totalorder %s42, 1
        %s778 = scalar_select %p777, %s42, 1
        %s779 = scalar_lea.vmem %s3, %s778
        %p780 = pneg %p136
        %p781 = pneg %p133
        %s782 = sand.u32 %s42, 1
        %s783 = scalar_lea.sflag [#allocation6], %s782
        %s784 = sand.u32 %s149, 1
        %s785 = smul.addr %s784, 128
        %s786 = scalar_lea.vmem [#allocation7], %s785
        %p787 = pneg %p162
        %p788 = pneg %p159
        %p789 = scmp.lt.s32.totalorder %s42, 1
        %s790 = scalar_select %p789, %s42, 1
        %s791 = scalar_lea.vmem %s5, %s790
        %p792 = pneg %p188
        %p793 = pneg %p185
        %s794 = sand.u32 %s42, 1
        %s795 = scalar_lea.sflag [#allocation9], %s794
        %s796 = sand.u32 %s201, 1
        %s797 = smul.addr %s796, 128
        %s798 = scalar_lea.vmem [#allocation8], %s797
        %p799 = pneg %p214
        %p800 = pneg %p211
        %p801 = scmp.lt.s32.totalorder %s42, 1
        %s802 = scalar_select %p801, %s42, 1
        %s803 = scalar_lea.vmem %s7, %s802
        %p804 = pneg %p240
        %p805 = pneg %p237
        %p806 = scmp.lt.s32.totalorder %s42, 1
        %s807 = scalar_select %p806, %s42, 1
        %s808 = scalar_lea.vmem %s8, %s807
        %p809 = pneg %p266
        %p810 = pneg %p263
        %p811 = scmp.lt.s32.totalorder %s42, 1
        %s812 = scalar_select %p811, %s42, 1
        %s813 = scalar_lea.vmem %s9, %s812
        %p814 = pneg %p292
        %p815 = pneg %p289
        %s816 = sand.u32 %s42, 1
        %s817 = scalar_lea.sflag [#allocation9], %s816
        %s818 = sand.u32 %s305, 1
        %s819 = smul.addr %s818, 128
        %s820 = scalar_lea.vmem [#allocation10], %s819
        %p821 = pneg %p318
        %p822 = pneg %p315
        %p823 = scmp.lt.s32.totalorder %s42, 1
        %s824 = scalar_select %p823, %s42, 1
        %s825 = scalar_lea.vmem %s11, %s824
        %p826 = pneg %p344
        %p827 = pneg %p341
        %s828 = sand.u32 %s42, 1
        %s829 = scalar_lea.sflag [#allocation12], %s828
        %s830 = sand.u32 %s357, 1
        %s831 = smul.addr %s830, 128
        %s832 = scalar_lea.vmem [#allocation11], %s831
        %p833 = pneg %p370
        %p834 = pneg %p367
        %p835 = scmp.lt.s32.totalorder %s42, 1
        %s836 = scalar_select %p835, %s42, 1
        %s837 = scalar_lea.vmem %s13, %s836
        %p838 = pneg %p396
        %p839 = pneg %p393
        %s840 = sand.u32 %s42, 1
        %s841 = scalar_lea.sflag [#allocation12], %s840
        %s842 = sand.u32 %s409, 1
        %s843 = smul.addr %s842, 128
        %s844 = scalar_lea.vmem [#allocation13], %s843
        %p845 = pneg %p422
        %p846 = pneg %p419
        %p847 = scmp.lt.s32.totalorder %s42, 1
        %s848 = scalar_select %p847, %s42, 1
        %s849 = scalar_lea.vmem %s15, %s848
        %p850 = pneg %p448
        %p851 = pneg %p445
        %p852 = pneg %p474
        %p853 = pneg %p471
        %s854 = sand.u32 %s461, 1
        %s855 = scalar_lea.sflag [#allocation4], %s854
        %s856 = sand.u32 %s461, 1
        %s857 = smul.addr %s856, 2
        %s858 = scalar_lea.vmem [#allocation14], %s857
        %p859 = scmp.lt.s32.totalorder %s42, 1
        %s860 = scalar_select %p859, %s42, 1
        %s861 = scalar_lea.vmem %s3, %s860
        %p862 = scmp.lt.s32.totalorder %s42, 1
        %s863 = scalar_select %p862, %s42, 1
        %s864 = scalar_lea.vmem %s5, %s863
        %p865 = scmp.lt.s32.totalorder %s42, 1
        %s866 = scalar_select %p865, %s42, 1
        %s867 = scalar_lea.vmem %s7, %s866
        %p868 = scmp.lt.s32.totalorder %s42, 1
        %s869 = scalar_select %p868, %s42, 1
        %s870 = scalar_lea.vmem %s8, %s869
        %p871 = scmp.lt.s32.totalorder %s42, 1
        %s872 = scalar_select %p871, %s42, 1
        %s873 = scalar_lea.vmem %s9, %s872
        %p874 = scmp.lt.s32.totalorder %s42, 1
        %s875 = scalar_select %p874, %s42, 1
        %s876 = scalar_lea.vmem %s11, %s875
        %p877 = scmp.lt.s32.totalorder %s42, 1
        %s878 = scalar_select %p877, %s42, 1
        %s879 = scalar_lea.vmem %s13, %s878
        %p880 = scmp.lt.s32.totalorder %s42, 1
        %s881 = scalar_select %p880, %s42, 1
        %s882 = scalar_lea.vmem %s15, %s881
        %p883 = scmp.eq.s32.totalorder %s42, 0
        %s884 = scalar_select %p883, 32, 24
        %s885 = scalar_select %p883, 0.03125, 0.041666668
        %v886 = vld [vmem:[%s702] sm:$0xff]
        %v887 = vld [vmem:[%s702 + $0x8] sm:$0xff]
        %v888 = vld [vmem:[%s711] sm:$0xff]
        %v889 = vld [vmem:[%s711 + $0x8] sm:$0xff]
        %v890 = vld [vmem:[%s711 + $0x10] sm:$0xff]
        %v891 = vld [vmem:[%s711 + $0x18] sm:$0xff]
        %v892 = vld [vmem:[%s711 + $0x20] sm:$0xff]
        %v893 = vld [vmem:[%s711 + $0x28] sm:$0xff]
        %v894 = vld [vmem:[%s711 + $0x30] sm:$0xff]
        %v895 = vld [vmem:[%s711 + $0x38] sm:$0xff]
        %v896 = vld [vmem:[%s711 + $0x40] sm:$0xff]
        %v897 = vld [vmem:[%s711 + $0x48] sm:$0xff]
        %v898 = vld [vmem:[%s711 + $0x50] sm:$0xff]
        %v899 = vld [vmem:[%s711 + $0x58] sm:$0xff]
        %v900 = vld [vmem:[%s711 + $0x60] sm:$0xff]
        %v901 = vld [vmem:[%s711 + $0x68] sm:$0xff]
        %v902 = vld [vmem:[%s711 + $0x70] sm:$0xff]
        %v903 = vld [vmem:[%s711 + $0x78] sm:$0xff]
        %v904 = vld [vmem:[%s861] sm:$0x1]
        %v906 = vlaneseq
        %v907 = vshrl.u32 %v906, 7
        %v908 = vsub.s32 0, %v907
        %v909 = vrot.slane %v904, %v908
        %911 = vmatprep.subr.mxu0 0.0
        %912 = vmatpush1.msra.mxu0 %v888
        %913 = vmatprep.subr.mxu0 0.0
        %914 = vmatpush1.msra.mxu0 %v889
        %915 = vmatprep.subr.mxu0 0.0
        %916 = vmatpush1.msra.mxu0 %v890
        %917 = vmatprep.subr.mxu0 0.0
        %918 = vmatpush1.msra.mxu0 %v891
        %919 = vmatprep.subr.mxu0 0.0
        %920 = vmatpush1.msra.mxu0 %v892
        %921 = vmatprep.subr.mxu0 0.0
        %922 = vmatpush1.msra.mxu0 %v893
        %923 = vmatprep.subr.mxu0 0.0
        %924 = vmatpush1.msra.mxu0 %v894
        %925 = vmatprep.subr.mxu0 0.0
        %926 = vmatpush1.msra.mxu0 %v895
        %927 = vmatprep.subr.mxu0 0.0
        %928 = vmatpush1.msra.mxu0 %v896
        %929 = vmatprep.subr.mxu0 0.0
        %930 = vmatpush1.msra.mxu0 %v897
        %931 = vmatprep.subr.mxu0 0.0
        %932 = vmatpush1.msra.mxu0 %v898
        %933 = vmatprep.subr.mxu0 0.0
        %934 = vmatpush1.msra.mxu0 %v899
        %935 = vmatprep.subr.mxu0 0.0
        %936 = vmatpush1.msra.mxu0 %v900
        %937 = vmatprep.subr.mxu0 0.0
        %938 = vmatpush1.msra.mxu0 %v901
        %939 = vmatprep.subr.mxu0 0.0
        %940 = vmatpush1.msra.mxu0 %v902
        %941 = vmatprep.subr.mxu0 0.0
        %942 = vmatpush1.msra.mxu0 %v903
        %943 = vmatprep.subr.mxu0 0.0
        %944 = vmatpush1.msra.mxu0 0.0
        %945 = vmatprep.subr.mxu0 0.0
        %946 = vmatpush1.msra.mxu0 0.0
        %947 = vmatprep.subr.mxu0 0.0
        %948 = vmatpush1.msra.mxu0 0.0
        %949 = vmatprep.subr.mxu0 0.0
        %950 = vmatpush1.msra.mxu0 0.0
        %951 = vmatprep.subr.mxu0 0.0
        %952 = vmatpush1.msra.mxu0 0.0
        %953 = vmatprep.subr.mxu0 0.0
        %954 = vmatpush1.msra.mxu0 0.0
        %955 = vmatprep.subr.mxu0 0.0
        %956 = vmatpush1.msra.mxu0 0.0
        %957 = vmatprep.subr.mxu0 0.0
        %958 = vmatpush1.msra.mxu0 0.0
        %959 = vmatprep.subr.mxu0 0.0
        %960 = vmatpush1.msra.mxu0 0.0
        %961 = vmatprep.subr.mxu0 0.0
        %962 = vmatpush1.msra.mxu0 0.0
        %963 = vmatprep.subr.mxu0 0.0
        %964 = vmatpush1.msra.mxu0 0.0
        %965 = vmatprep.subr.mxu0 0.0
        %966 = vmatpush1.msra.mxu0 0.0
        %967 = vmatprep.subr.mxu0 0.0
        %968 = vmatpush1.msra.mxu0 0.0
        %969 = vmatprep.subr.mxu0 0.0
        %970 = vmatpush1.msra.mxu0 0.0
        %971 = vmatprep.subr.mxu0 0.0
        %972 = vmatpush1.msra.mxu0 0.0
        %973 = vmatprep.subr.mxu0 0.0
        %974 = vmatpush1.msra.mxu0 0.0
        %975 = vmatprep.mubr.f32.mxu0 0.0
        %976 = vmatmul.mubr.f32.gmra.mrb[0].mxu0 %v886
        %v977 = vpop.f32.mrb[0].mxu0
        %v978 = vadd.f32 %v909, %v977
        %v979 = vpop.f32.mrb[0].mxu0
        %980 = vmatprep.mubr.f32.mxu0 0.0
        %981 = vmatmul.mubr.f32.gmra.mrb[0].mxu0 %v887
        %v982 = vpop.f32.mrb[0].mxu0
        %v983 = vadd.f32 %v909, %v982
        %v984 = vpop.f32.mrb[0].mxu0
        %985 = vdwg.mxu0
        %v986 = vxor.u32 %v978, 2147483648
        %v987 = vxor.u32 %v983, 2147483648
        %v988 = vmul.f32 %v986, 1.442695
        %v989 = vpow.pop %v988
        %v990 = vmul.f32 %v987, 1.442695
        %v991 = vpow.pop %v990
        %v992 = vadd.f32 %v989, 1.0
        %v993 = vadd.f32 %v991, 1.0
        %v994 = vrcp.pop %v992
        %v995 = vmul.f32 1.0, %v994
        %v996 = vrcp.pop %v993
        %v997 = vmul.f32 1.0, %v996
        %v998 = vmul.f32 %v978, %v995
        %v999 = vmul.f32 %v983, %v997
        %v1000 = vld [vmem:[%s720] sm:$0xff]
        %v1001 = vld [vmem:[%s720 + $0x8] sm:$0xff]
        %v1002 = vld [vmem:[%s720 + $0x10] sm:$0xff]
        %v1003 = vld [vmem:[%s720 + $0x18] sm:$0xff]
        %v1004 = vld [vmem:[%s720 + $0x20] sm:$0xff]
        %v1005 = vld [vmem:[%s720 + $0x28] sm:$0xff]
        %v1006 = vld [vmem:[%s720 + $0x30] sm:$0xff]
        %v1007 = vld [vmem:[%s720 + $0x38] sm:$0xff]
        %v1008 = vld [vmem:[%s720 + $0x40] sm:$0xff]
        %v1009 = vld [vmem:[%s720 + $0x48] sm:$0xff]
        %v1010 = vld [vmem:[%s720 + $0x50] sm:$0xff]
        %v1011 = vld [vmem:[%s720 + $0x58] sm:$0xff]
        %v1012 = vld [vmem:[%s720 + $0x60] sm:$0xff]
        %v1013 = vld [vmem:[%s720 + $0x68] sm:$0xff]
        %v1014 = vld [vmem:[%s720 + $0x70] sm:$0xff]
        %v1015 = vld [vmem:[%s720 + $0x78] sm:$0xff]
        %v1016 = vld [vmem:[%s864] sm:$0x1]
        %v1018 = vlaneseq
        %v1019 = vshrl.u32 %v1018, 7
        %v1020 = vsub.s32 0, %v1019
        %v1021 = vrot.slane %v1016, %v1020
        %1023 = vmatprep.subr.mxu0 0.0
        %1024 = vmatpush1.msra.mxu0 %v1000
        %1025 = vmatprep.subr.mxu0 0.0
        %1026 = vmatpush1.msra.mxu0 %v1001
        %1027 = vmatprep.subr.mxu0 0.0
        %1028 = vmatpush1.msra.mxu0 %v1002
        %1029 = vmatprep.subr.mxu0 0.0
        %1030 = vmatpush1.msra.mxu0 %v1003
        %1031 = vmatprep.subr.mxu0 0.0
        %1032 = vmatpush1.msra.mxu0 %v1004
        %1033 = vmatprep.subr.mxu0 0.0
        %1034 = vmatpush1.msra.mxu0 %v1005
        %1035 = vmatprep.subr.mxu0 0.0
        %1036 = vmatpush1.msra.mxu0 %v1006
        %1037 = vmatprep.subr.mxu0 0.0
        %1038 = vmatpush1.msra.mxu0 %v1007
        %1039 = vmatprep.subr.mxu0 0.0
        %1040 = vmatpush1.msra.mxu0 %v1008
        %1041 = vmatprep.subr.mxu0 0.0
        %1042 = vmatpush1.msra.mxu0 %v1009
        %1043 = vmatprep.subr.mxu0 0.0
        %1044 = vmatpush1.msra.mxu0 %v1010
        %1045 = vmatprep.subr.mxu0 0.0
        %1046 = vmatpush1.msra.mxu0 %v1011
        %1047 = vmatprep.subr.mxu0 0.0
        %1048 = vmatpush1.msra.mxu0 %v1012
        %1049 = vmatprep.subr.mxu0 0.0
        %1050 = vmatpush1.msra.mxu0 %v1013
        %1051 = vmatprep.subr.mxu0 0.0
        %1052 = vmatpush1.msra.mxu0 %v1014
        %1053 = vmatprep.subr.mxu0 0.0
        %1054 = vmatpush1.msra.mxu0 %v1015
        %1055 = vmatprep.subr.mxu0 0.0
        %1056 = vmatpush1.msra.mxu0 0.0
        %1057 = vmatprep.subr.mxu0 0.0
        %1058 = vmatpush1.msra.mxu0 0.0
        %1059 = vmatprep.subr.mxu0 0.0
        %1060 = vmatpush1.msra.mxu0 0.0
        %1061 = vmatprep.subr.mxu0 0.0
        %1062 = vmatpush1.msra.mxu0 0.0
        %1063 = vmatprep.subr.mxu0 0.0
        %1064 = vmatpush1.msra.mxu0 0.0
        %1065 = vmatprep.subr.mxu0 0.0
        %1066 = vmatpush1.msra.mxu0 0.0
        %1067 = vmatprep.subr.mxu0 0.0
        %1068 = vmatpush1.msra.mxu0 0.0
        %1069 = vmatprep.subr.mxu0 0.0
        %1070 = vmatpush1.msra.mxu0 0.0
        %1071 = vmatprep.subr.mxu0 0.0
        %1072 = vmatpush1.msra.mxu0 0.0
        %1073 = vmatprep.subr.mxu0 0.0
        %1074 = vmatpush1.msra.mxu0 0.0
        %1075 = vmatprep.subr.mxu0 0.0
        %1076 = vmatpush1.msra.mxu0 0.0
        %1077 = vmatprep.subr.mxu0 0.0
        %1078 = vmatpush1.msra.mxu0 0.0
        %1079 = vmatprep.subr.mxu0 0.0
        %1080 = vmatpush1.msra.mxu0 0.0
        %1081 = vmatprep.subr.mxu0 0.0
        %1082 = vmatpush1.msra.mxu0 0.0
        %1083 = vmatprep.subr.mxu0 0.0
        %1084 = vmatpush1.msra.mxu0 0.0
        %1085 = vmatprep.subr.mxu0 0.0
        %1086 = vmatpush1.msra.mxu0 0.0
        %1087 = vmatprep.mubr.f32.mxu0 0.0
        %1088 = vmatmul.mubr.f32.gmra.mrb[0].mxu0 %v998
        %v1089 = vpop.f32.mrb[0].mxu0
        %v1090 = vadd.f32 %v1021, %v1089
        %v1091 = vpop.f32.mrb[0].mxu0
        %1092 = vmatprep.mubr.f32.mxu0 0.0
        %1093 = vmatmul.mubr.f32.gmra.mrb[0].mxu0 %v999
        %v1094 = vpop.f32.mrb[0].mxu0
        %v1095 = vadd.f32 %v1021, %v1094
        %v1096 = vpop.f32.mrb[0].mxu0
        %1097 = vdwg.mxu0
        %v1098 = vxor.u32 %v1090, 2147483648
        %v1099 = vxor.u32 %v1095, 2147483648
        %v1100 = vmul.f32 %v1098, 1.442695
        %v1101 = vpow.pop %v1100
        %v1102 = vmul.f32 %v1099, 1.442695
        %v1103 = vpow.pop %v1102
        %v1104 = vadd.f32 %v1101, 1.0
        %v1105 = vadd.f32 %v1103, 1.0
        %v1106 = vrcp.pop %v1104
        %v1107 = vmul.f32 1.0, %v1106
        %v1108 = vrcp.pop %v1105
        %v1109 = vmul.f32 1.0, %v1108
        %v1110 = vmul.f32 %v1090, %v1107
        %v1111 = vmul.f32 %v1095, %v1109
        %v1112 = vld [vmem:[%s729] sm:$0xff]
        %v1113 = vld [vmem:[%s729 + $0x8] sm:$0xff]
        %v1114 = vld [vmem:[%s729 + $0x10] sm:$0xff]
        %v1115 = vld [vmem:[%s729 + $0x18] sm:$0xff]
        %v1116 = vld [vmem:[%s729 + $0x20] sm:$0xff]
        %v1117 = vld [vmem:[%s729 + $0x28] sm:$0xff]
        %v1118 = vld [vmem:[%s729 + $0x30] sm:$0xff]
        %v1119 = vld [vmem:[%s729 + $0x38] sm:$0xff]
        %v1120 = vld [vmem:[%s729 + $0x40] sm:$0xff]
        %v1121 = vld [vmem:[%s729 + $0x48] sm:$0xff]
        %v1122 = vld [vmem:[%s729 + $0x50] sm:$0xff]
        %v1123 = vld [vmem:[%s729 + $0x58] sm:$0xff]
        %v1124 = vld [vmem:[%s729 + $0x60] sm:$0xff]
        %v1125 = vld [vmem:[%s729 + $0x68] sm:$0xff]
        %v1126 = vld [vmem:[%s729 + $0x70] sm:$0xff]
        %v1127 = vld [vmem:[%s729 + $0x78] sm:$0xff]
        %v1128 = vld [vmem:[%s867] sm:$0x1]
        %v1130 = vlaneseq
        %v1131 = vshrl.u32 %v1130, 7
        %v1132 = vsub.s32 0, %v1131
        %v1133 = vrot.slane %v1128, %v1132
        %1135 = vmatprep.subr.mxu0 0.0
        %1136 = vmatpush1.msra.mxu0 %v1112
        %1137 = vmatprep.subr.mxu0 0.0
        %1138 = vmatpush1.msra.mxu0 %v1113
        %1139 = vmatprep.subr.mxu0 0.0
        %1140 = vmatpush1.msra.mxu0 %v1114
        %1141 = vmatprep.subr.mxu0 0.0
        %1142 = vmatpush1.msra.mxu0 %v1115
        %1143 = vmatprep.subr.mxu0 0.0
        %1144 = vmatpush1.msra.mxu0 %v1116
        %1145 = vmatprep.subr.mxu0 0.0
        %1146 = vmatpush1.msra.mxu0 %v1117
        %1147 = vmatprep.subr.mxu0 0.0
        %1148 = vmatpush1.msra.mxu0 %v1118
        %1149 = vmatprep.subr.mxu0 0.0
        %1150 = vmatpush1.msra.mxu0 %v1119
        %1151 = vmatprep.subr.mxu0 0.0
        %1152 = vmatpush1.msra.mxu0 %v1120
        %1153 = vmatprep.subr.mxu0 0.0
        %1154 = vmatpush1.msra.mxu0 %v1121
        %1155 = vmatprep.subr.mxu0 0.0
        %1156 = vmatpush1.msra.mxu0 %v1122
        %1157 = vmatprep.subr.mxu0 0.0
        %1158 = vmatpush1.msra.mxu0 %v1123
        %1159 = vmatprep.subr.mxu0 0.0
        %1160 = vmatpush1.msra.mxu0 %v1124
        %1161 = vmatprep.subr.mxu0 0.0
        %1162 = vmatpush1.msra.mxu0 %v1125
        %1163 = vmatprep.subr.mxu0 0.0
        %1164 = vmatpush1.msra.mxu0 %v1126
        %1165 = vmatprep.subr.mxu0 0.0
        %1166 = vmatpush1.msra.mxu0 %v1127
        %1167 = vmatprep.subr.mxu0 0.0
        %1168 = vmatpush1.msra.mxu0 0.0
        %1169 = vmatprep.subr.mxu0 0.0
        %1170 = vmatpush1.msra.mxu0 0.0
        %1171 = vmatprep.subr.mxu0 0.0
        %1172 = vmatpush1.msra.mxu0 0.0
        %1173 = vmatprep.subr.mxu0 0.0
        %1174 = vmatpush1.msra.mxu0 0.0
        %1175 = vmatprep.subr.mxu0 0.0
        %1176 = vmatpush1.msra.mxu0 0.0
        %1177 = vmatprep.subr.mxu0 0.0
        %1178 = vmatpush1.msra.mxu0 0.0
        %1179 = vmatprep.subr.mxu0 0.0
        %1180 = vmatpush1.msra.mxu0 0.0
        %1181 = vmatprep.subr.mxu0 0.0
        %1182 = vmatpush1.msra.mxu0 0.0
        %1183 = vmatprep.subr.mxu0 0.0
        %1184 = vmatpush1.msra.mxu0 0.0
        %1185 = vmatprep.subr.mxu0 0.0
        %1186 = vmatpush1.msra.mxu0 0.0
        %1187 = vmatprep.subr.mxu0 0.0
        %1188 = vmatpush1.msra.mxu0 0.0
        %1189 = vmatprep.subr.mxu0 0.0
        %1190 = vmatpush1.msra.mxu0 0.0
        %1191 = vmatprep.subr.mxu0 0.0
        %1192 = vmatpush1.msra.mxu0 0.0
        %1193 = vmatprep.subr.mxu0 0.0
        %1194 = vmatpush1.msra.mxu0 0.0
        %1195 = vmatprep.subr.mxu0 0.0
        %1196 = vmatpush1.msra.mxu0 0.0
        %1197 = vmatprep.subr.mxu0 0.0
        %1198 = vmatpush1.msra.mxu0 0.0
        %1199 = vmatprep.mubr.f32.mxu0 0.0
        %1200 = vmatmul.mubr.f32.gmra.mrb[0].mxu0 %v1110
        %v1201 = vpop.f32.mrb[0].mxu0
        %v1202 = vadd.f32 %v1133, %v1201
        %v1203 = vpop.f32.mrb[0].mxu0
        %1204 = vmatprep.mubr.f32.mxu0 0.0
        %1205 = vmatmul.mubr.f32.gmra.mrb[0].mxu0 %v1111
        %v1206 = vpop.f32.mrb[0].mxu0
        %v1207 = vadd.f32 %v1133, %v1206
        %v1208 = vpop.f32.mrb[0].mxu0
        %1209 = vdwg.mxu0
        %v1210 = vxor.u32 %v1202, 2147483648
        %v1211 = vxor.u32 %v1207, 2147483648
        %v1212 = vmul.f32 %v1210, 1.442695
        %v1213 = vpow.pop %v1212
        %v1214 = vmul.f32 %v1211, 1.442695
        %v1215 = vpow.pop %v1214
        %v1216 = vadd.f32 %v1213, 1.0
        %v1217 = vadd.f32 %v1215, 1.0
        %v1218 = vrcp.pop %v1216
        %v1219 = vmul.f32 1.0, %v1218
        %v1220 = vrcp.pop %v1217
        %v1221 = vmul.f32 1.0, %v1220
        %v1222 = vmul.f32 %v1202, %v1219
        %v1223 = vmul.f32 %v1207, %v1221
        %v1224 = vlaneseq
        %v1225 = vand.u32 %v1224, 127
        %v1226 = vstv %s884
        %vm1227 = vcmp.lt.s32.totalorder %v1225, %v1226
        %v1228 = vsel %vm1227, 1, 0
        %v1229 = vcvt.s32.f32 %v1228
        %1230 = vadd.xlane.f32.xlu0 %v1222
        %v1231 = vpop.xlane.xlu0 %1230
        %1232 = vadd.xlane.f32.xlu0 %v1223
        %v1233 = vpop.xlane.xlu0 %1232
        %v1234 = vstv %s885
        %v1235 = vmul.f32 %v1231, %v1234
        %v1236 = vmul.f32 %v1233, %v1234
        %v1237 = vsub.f32 %v1222, %v1235
        %v1238 = vsub.f32 %v1223, %v1236
        %v1239 = vmul.f32 %v1237, %v1229
        %v1240 = vmul.f32 %v1238, %v1229
        %v1241 = vmul.f32 %v1239, %v1239
        %v1242 = vmul.f32 %v1240, %v1240
        %1243 = vadd.xlane.f32.xlu0 %v1241
        %v1244 = vpop.xlane.xlu0 %1243
        %1245 = vadd.xlane.f32.xlu0 %v1242
        %v1246 = vpop.xlane.xlu0 %1245
        %v1247 = vmul.f32 %v1244, %v1234
        %v1248 = vmul.f32 %v1246, %v1234
        %v1249 = vadd.f32 %v1247, 1e-05
        %v1250 = vadd.f32 %v1248, 1e-05
        %v1251 = vrsqrt.pop %v1249
        %v1252 = vrsqrt.pop %v1250
        %v1253 = vmul.f32 %v1239, %v1251
        %v1254 = vmul.f32 %v1240, %v1252
        %v1255 = vld [vmem:[%s870] sm:$0x1]
        %v1257 = vlaneseq
        %v1258 = vshrl.u32 %v1257, 7
        %v1259 = vsub.s32 0, %v1258
        %v1260 = vrot.slane %v1255, %v1259
        %v1262 = vmul.f32 %v1253, %v1260
        %v1263 = vmul.f32 %v1254, %v1260
        %v1264 = vld [vmem:[%s873] sm:$0x1]
        %v1266 = vlaneseq
        %v1267 = vshrl.u32 %v1266, 7
        %v1268 = vsub.s32 0, %v1267
        %v1269 = vrot.slane %v1264, %v1268
        %v1271 = vadd.f32 %v1262, %v1269
        %v1272 = vadd.f32 %v1263, %v1269
        %v1273 = vld [vmem:[%s1] sm:$0x3]
        %vm1274 = vcmask 130048
        %v1276 = vsel %vm1274, %v1273, 0
        %1278 = vmatprep.subr.mxu0 0.0
        %1279 = vmatpush1.msra.mxu0 %v1271
        %1280 = vmatprep.subr.mxu0 0.0
        %1281 = vmatpush1.msra.mxu0 %v1272
        %1282 = vmatprep.subr.mxu0 0.0
        %1283 = vmatpush1.msra.mxu0 0.0
        %1284 = vmatprep.subr.mxu0 0.0
        %1285 = vmatpush1.msra.mxu0 0.0
        %1286 = vmatprep.subr.mxu0 0.0
        %1287 = vmatpush1.msra.mxu0 0.0
        %1288 = vmatprep.subr.mxu0 0.0
        %1289 = vmatpush1.msra.mxu0 0.0
        %1290 = vmatprep.subr.mxu0 0.0
        %1291 = vmatpush1.msra.mxu0 0.0
        %1292 = vmatprep.subr.mxu0 0.0
        %1293 = vmatpush1.msra.mxu0 0.0
        %1294 = vmatprep.subr.mxu0 0.0
        %1295 = vmatpush1.msra.mxu0 0.0
        %1296 = vmatprep.subr.mxu0 0.0
        %1297 = vmatpush1.msra.mxu0 0.0
        %1298 = vmatprep.subr.mxu0 0.0
        %1299 = vmatpush1.msra.mxu0 0.0
        %1300 = vmatprep.subr.mxu0 0.0
        %1301 = vmatpush1.msra.mxu0 0.0
        %1302 = vmatprep.subr.mxu0 0.0
        %1303 = vmatpush1.msra.mxu0 0.0
        %1304 = vmatprep.subr.mxu0 0.0
        %1305 = vmatpush1.msra.mxu0 0.0
        %1306 = vmatprep.subr.mxu0 0.0
        %1307 = vmatpush1.msra.mxu0 0.0
        %1308 = vmatprep.subr.mxu0 0.0
        %1309 = vmatpush1.msra.mxu0 0.0
        %1310 = vmatprep.subr.mxu0 0.0
        %1311 = vmatpush1.msra.mxu0 0.0
        %1312 = vmatprep.subr.mxu0 0.0
        %1313 = vmatpush1.msra.mxu0 0.0
        %1314 = vmatprep.subr.mxu0 0.0
        %1315 = vmatpush1.msra.mxu0 0.0
        %1316 = vmatprep.subr.mxu0 0.0
        %1317 = vmatpush1.msra.mxu0 0.0
        %1318 = vmatprep.subr.mxu0 0.0
        %1319 = vmatpush1.msra.mxu0 0.0
        %1320 = vmatprep.subr.mxu0 0.0
        %1321 = vmatpush1.msra.mxu0 0.0
        %1322 = vmatprep.subr.mxu0 0.0
        %1323 = vmatpush1.msra.mxu0 0.0
        %1324 = vmatprep.subr.mxu0 0.0
        %1325 = vmatpush1.msra.mxu0 0.0
        %1326 = vmatprep.subr.mxu0 0.0
        %1327 = vmatpush1.msra.mxu0 0.0
        %1328 = vmatprep.subr.mxu0 0.0
        %1329 = vmatpush1.msra.mxu0 0.0
        %1330 = vmatprep.subr.mxu0 0.0
        %1331 = vmatpush1.msra.mxu0 0.0
        %1332 = vmatprep.subr.mxu0 0.0
        %1333 = vmatpush1.msra.mxu0 0.0
        %1334 = vmatprep.subr.mxu0 0.0
        %1335 = vmatpush1.msra.mxu0 0.0
        %1336 = vmatprep.subr.mxu0 0.0
        %1337 = vmatpush1.msra.mxu0 0.0
        %1338 = vmatprep.subr.mxu0 0.0
        %1339 = vmatpush1.msra.mxu0 0.0
        %1340 = vmatprep.subr.mxu0 0.0
        %1341 = vmatpush1.msra.mxu0 0.0
        %1342 = vmatprep.mubr.f32.mxu0 0.0
        %1343 = vmatmul.mubr.f32.gmra.mrb[0].mxu0 %v1276
        %v1344 = vpop.f32.mrb[0].mxu0
        %v1345 = vadd.f32 0.0, %v1344
        %v1346 = vpop.f32.mrb[0].mxu0
        %1347 = vdwg.mxu0
        %v1348 = vld [vmem:[%s738] sm:$0xff]
        %v1349 = vld [vmem:[%s738 + $0x8] sm:$0xff]
        %v1350 = vld [vmem:[%s738 + $0x10] sm:$0xff]
        %v1351 = vld [vmem:[%s738 + $0x18] sm:$0xff]
        %v1352 = vld [vmem:[%s738 + $0x20] sm:$0xff]
        %v1353 = vld [vmem:[%s738 + $0x28] sm:$0xff]
        %v1354 = vld [vmem:[%s738 + $0x30] sm:$0xff]
        %v1355 = vld [vmem:[%s738 + $0x38] sm:$0xff]
        %v1356 = vld [vmem:[%s738 + $0x40] sm:$0xff]
        %v1357 = vld [vmem:[%s738 + $0x48] sm:$0xff]
        %v1358 = vld [vmem:[%s738 + $0x50] sm:$0xff]
        %v1359 = vld [vmem:[%s738 + $0x58] sm:$0xff]
        %v1360 = vld [vmem:[%s738 + $0x60] sm:$0xff]
        %v1361 = vld [vmem:[%s738 + $0x68] sm:$0xff]
        %v1362 = vld [vmem:[%s738 + $0x70] sm:$0xff]
        %v1363 = vld [vmem:[%s738 + $0x78] sm:$0xff]
        %v1364 = vld [vmem:[%s876] sm:$0x1]
        %v1366 = vlaneseq
        %v1367 = vshrl.u32 %v1366, 7
        %v1368 = vsub.s32 0, %v1367
        %v1369 = vrot.slane %v1364, %v1368
        %1371 = vmatprep.subr.mxu0 0.0
        %1372 = vmatpush1.msra.mxu0 %v1348
        %1373 = vmatprep.subr.mxu0 0.0
        %1374 = vmatpush1.msra.mxu0 %v1349
        %1375 = vmatprep.subr.mxu0 0.0
        %1376 = vmatpush1.msra.mxu0 %v1350
        %1377 = vmatprep.subr.mxu0 0.0
        %1378 = vmatpush1.msra.mxu0 %v1351
        %1379 = vmatprep.subr.mxu0 0.0
        %1380 = vmatpush1.msra.mxu0 %v1352
        %1381 = vmatprep.subr.mxu0 0.0
        %1382 = vmatpush1.msra.mxu0 %v1353
        %1383 = vmatprep.subr.mxu0 0.0
        %1384 = vmatpush1.msra.mxu0 %v1354
        %1385 = vmatprep.subr.mxu0 0.0
        %1386 = vmatpush1.msra.mxu0 %v1355
        %1387 = vmatprep.subr.mxu0 0.0
        %1388 = vmatpush1.msra.mxu0 %v1356
        %1389 = vmatprep.subr.mxu0 0.0
        %1390 = vmatpush1.msra.mxu0 %v1357
        %1391 = vmatprep.subr.mxu0 0.0
        %1392 = vmatpush1.msra.mxu0 %v1358
        %1393 = vmatprep.subr.mxu0 0.0
        %1394 = vmatpush1.msra.mxu0 %v1359
        %1395 = vmatprep.subr.mxu0 0.0
        %1396 = vmatpush1.msra.mxu0 %v1360
        %1397 = vmatprep.subr.mxu0 0.0
        %1398 = vmatpush1.msra.mxu0 %v1361
        %1399 = vmatprep.subr.mxu0 0.0
        %1400 = vmatpush1.msra.mxu0 %v1362
        %1401 = vmatprep.subr.mxu0 0.0
        %1402 = vmatpush1.msra.mxu0 %v1363
        %1403 = vmatprep.subr.mxu0 0.0
        %1404 = vmatpush1.msra.mxu0 0.0
        %1405 = vmatprep.subr.mxu0 0.0
        %1406 = vmatpush1.msra.mxu0 0.0
        %1407 = vmatprep.subr.mxu0 0.0
        %1408 = vmatpush1.msra.mxu0 0.0
        %1409 = vmatprep.subr.mxu0 0.0
        %1410 = vmatpush1.msra.mxu0 0.0
        %1411 = vmatprep.subr.mxu0 0.0
        %1412 = vmatpush1.msra.mxu0 0.0
        %1413 = vmatprep.subr.mxu0 0.0
        %1414 = vmatpush1.msra.mxu0 0.0
        %1415 = vmatprep.subr.mxu0 0.0
        %1416 = vmatpush1.msra.mxu0 0.0
        %1417 = vmatprep.subr.mxu0 0.0
        %1418 = vmatpush1.msra.mxu0 0.0
        %1419 = vmatprep.subr.mxu0 0.0
        %1420 = vmatpush1.msra.mxu0 0.0
        %1421 = vmatprep.subr.mxu0 0.0
        %1422 = vmatpush1.msra.mxu0 0.0
        %1423 = vmatprep.subr.mxu0 0.0
        %1424 = vmatpush1.msra.mxu0 0.0
        %1425 = vmatprep.subr.mxu0 0.0
        %1426 = vmatpush1.msra.mxu0 0.0
        %1427 = vmatprep.subr.mxu0 0.0
        %1428 = vmatpush1.msra.mxu0 0.0
        %1429 = vmatprep.subr.mxu0 0.0
        %1430 = vmatpush1.msra.mxu0 0.0
        %1431 = vmatprep.subr.mxu0 0.0
        %1432 = vmatpush1.msra.mxu0 0.0
        %1433 = vmatprep.subr.mxu0 0.0
        %1434 = vmatpush1.msra.mxu0 0.0
        %1435 = vmatprep.mubr.f32.mxu0 0.0
        %1436 = vmatmul.mubr.f32.gmra.mrb[0].mxu0 %v1345
        %v1437 = vpop.f32.mrb[0].mxu0
        %v1438 = vadd.f32 %v1369, %v1437
        %v1439 = vpop.f32.mrb[0].mxu0
        %1440 = vdwg.mxu0
        %v1441 = vxor.u32 %v1438, 2147483648
        %v1442 = vmul.f32 %v1441, 1.442695
        %v1443 = vpow.pop %v1442
        %v1444 = vadd.f32 %v1443, 1.0
        %v1445 = vrcp.pop %v1444
        %v1446 = vmul.f32 1.0, %v1445
        %v1447 = vmul.f32 %v1438, %v1446
        %v1448 = vld [vmem:[%s747] sm:$0xff]
        %v1449 = vld [vmem:[%s747 + $0x8] sm:$0xff]
        %v1450 = vld [vmem:[%s747 + $0x10] sm:$0xff]
        %v1451 = vld [vmem:[%s747 + $0x18] sm:$0xff]
        %v1452 = vld [vmem:[%s747 + $0x20] sm:$0xff]
        %v1453 = vld [vmem:[%s747 + $0x28] sm:$0xff]
        %v1454 = vld [vmem:[%s747 + $0x30] sm:$0xff]
        %v1455 = vld [vmem:[%s747 + $0x38] sm:$0xff]
        %v1456 = vld [vmem:[%s747 + $0x40] sm:$0xff]
        %v1457 = vld [vmem:[%s747 + $0x48] sm:$0xff]
        %v1458 = vld [vmem:[%s747 + $0x50] sm:$0xff]
        %v1459 = vld [vmem:[%s747 + $0x58] sm:$0xff]
        %v1460 = vld [vmem:[%s747 + $0x60] sm:$0xff]
        %v1461 = vld [vmem:[%s747 + $0x68] sm:$0xff]
        %v1462 = vld [vmem:[%s747 + $0x70] sm:$0xff]
        %v1463 = vld [vmem:[%s747 + $0x78] sm:$0xff]
        %v1464 = vld [vmem:[%s879] sm:$0x1]
        %v1466 = vlaneseq
        %v1467 = vshrl.u32 %v1466, 7
        %v1468 = vsub.s32 0, %v1467
        %v1469 = vrot.slane %v1464, %v1468
        %1471 = vmatprep.subr.mxu0 0.0
        %1472 = vmatpush1.msra.mxu0 %v1448
        %1473 = vmatprep.subr.mxu0 0.0
        %1474 = vmatpush1.msra.mxu0 %v1449
        %1475 = vmatprep.subr.mxu0 0.0
        %1476 = vmatpush1.msra.mxu0 %v1450
        %1477 = vmatprep.subr.mxu0 0.0
        %1478 = vmatpush1.msra.mxu0 %v1451
        %1479 = vmatprep.subr.mxu0 0.0
        %1480 = vmatpush1.msra.mxu0 %v1452
        %1481 = vmatprep.subr.mxu0 0.0
        %1482 = vmatpush1.msra.mxu0 %v1453
        %1483 = vmatprep.subr.mxu0 0.0
        %1484 = vmatpush1.msra.mxu0 %v1454
        %1485 = vmatprep.subr.mxu0 0.0
        %1486 = vmatpush1.msra.mxu0 %v1455
        %1487 = vmatprep.subr.mxu0 0.0
        %1488 = vmatpush1.msra.mxu0 %v1456
        %1489 = vmatprep.subr.mxu0 0.0
        %1490 = vmatpush1.msra.mxu0 %v1457
        %1491 = vmatprep.subr.mxu0 0.0
        %1492 = vmatpush1.msra.mxu0 %v1458
        %1493 = vmatprep.subr.mxu0 0.0
        %1494 = vmatpush1.msra.mxu0 %v1459
        %1495 = vmatprep.subr.mxu0 0.0
        %1496 = vmatpush1.msra.mxu0 %v1460
        %1497 = vmatprep.subr.mxu0 0.0
        %1498 = vmatpush1.msra.mxu0 %v1461
        %1499 = vmatprep.subr.mxu0 0.0
        %1500 = vmatpush1.msra.mxu0 %v1462
        %1501 = vmatprep.subr.mxu0 0.0
        %1502 = vmatpush1.msra.mxu0 %v1463
        %1503 = vmatprep.subr.mxu0 0.0
        %1504 = vmatpush1.msra.mxu0 0.0
        %1505 = vmatprep.subr.mxu0 0.0
        %1506 = vmatpush1.msra.mxu0 0.0
        %1507 = vmatprep.subr.mxu0 0.0
        %1508 = vmatpush1.msra.mxu0 0.0
        %1509 = vmatprep.subr.mxu0 0.0
        %1510 = vmatpush1.msra.mxu0 0.0
        %1511 = vmatprep.subr.mxu0 0.0
        %1512 = vmatpush1.msra.mxu0 0.0
        %1513 = vmatprep.subr.mxu0 0.0
        %1514 = vmatpush1.msra.mxu0 0.0
        %1515 = vmatprep.subr.mxu0 0.0
        %1516 = vmatpush1.msra.mxu0 0.0
        %1517 = vmatprep.subr.mxu0 0.0
        %1518 = vmatpush1.msra.mxu0 0.0
        %1519 = vmatprep.subr.mxu0 0.0
        %1520 = vmatpush1.msra.mxu0 0.0
        %1521 = vmatprep.subr.mxu0 0.0
        %1522 = vmatpush1.msra.mxu0 0.0
        %1523 = vmatprep.subr.mxu0 0.0
        %1524 = vmatpush1.msra.mxu0 0.0
        %1525 = vmatprep.subr.mxu0 0.0
        %1526 = vmatpush1.msra.mxu0 0.0
        %1527 = vmatprep.subr.mxu0 0.0
        %1528 = vmatpush1.msra.mxu0 0.0
        %1529 = vmatprep.subr.mxu0 0.0
        %1530 = vmatpush1.msra.mxu0 0.0
        %1531 = vmatprep.subr.mxu0 0.0
        %1532 = vmatpush1.msra.mxu0 0.0
        %1533 = vmatprep.subr.mxu0 0.0
        %1534 = vmatpush1.msra.mxu0 0.0
        %1535 = vmatprep.mubr.f32.mxu0 0.0
        %1536 = vmatmul.mubr.f32.gmra.mrb[0].mxu0 %v1447
        %v1537 = vpop.f32.mrb[0].mxu0
        %v1538 = vadd.f32 %v1469, %v1537
        %v1539 = vpop.f32.mrb[0].mxu0
        %1540 = vdwg.mxu0
        %v1541 = vxor.u32 %v1538, 2147483648
        %v1542 = vmul.f32 %v1541, 1.442695
        %v1543 = vpow.pop %v1542
        %v1544 = vadd.f32 %v1543, 1.0
        %v1545 = vrcp.pop %v1544
        %v1546 = vmul.f32 1.0, %v1545
        %v1547 = vmul.f32 %v1538, %v1546
        %v1548 = vld [vmem:[%s756] sm:$0xff]
        %v1549 = vld [vmem:[%s756 + $0x8] sm:$0xff]
        %v1550 = vld [vmem:[%s756 + $0x10] sm:$0xff]
        %v1551 = vld [vmem:[%s756 + $0x18] sm:$0xff]
        %v1552 = vld [vmem:[%s756 + $0x20] sm:$0xff]
        %v1553 = vld [vmem:[%s756 + $0x28] sm:$0xff]
        %v1554 = vld [vmem:[%s756 + $0x30] sm:$0xff]
        %v1555 = vld [vmem:[%s756 + $0x38] sm:$0xff]
        %v1556 = vld [vmem:[%s756 + $0x40] sm:$0xff]
        %v1557 = vld [vmem:[%s756 + $0x48] sm:$0xff]
        %v1558 = vld [vmem:[%s756 + $0x50] sm:$0xff]
        %v1559 = vld [vmem:[%s756 + $0x58] sm:$0xff]
        %v1560 = vld [vmem:[%s756 + $0x60] sm:$0xff]
        %v1561 = vld [vmem:[%s756 + $0x68] sm:$0xff]
        %v1562 = vld [vmem:[%s756 + $0x70] sm:$0xff]
        %v1563 = vld [vmem:[%s756 + $0x78] sm:$0xff]
        %v1564 = vld [vmem:[%s882] sm:$0x1]
        %v1566 = vlaneseq
        %v1567 = vshrl.u32 %v1566, 7
        %v1568 = vsub.s32 0, %v1567
        %v1569 = vrot.slane %v1564, %v1568
        %1571 = vmatprep.subr.mxu0 0.0
        %1572 = vmatpush1.msra.mxu0 %v1548
        %1573 = vmatprep.subr.mxu0 0.0
        %1574 = vmatpush1.msra.mxu0 %v1549
        %1575 = vmatprep.subr.mxu0 0.0
        %1576 = vmatpush1.msra.mxu0 %v1550
        %1577 = vmatprep.subr.mxu0 0.0
        %1578 = vmatpush1.msra.mxu0 %v1551
        %1579 = vmatprep.subr.mxu0 0.0
        %1580 = vmatpush1.msra.mxu0 %v1552
        %1581 = vmatprep.subr.mxu0 0.0
        %1582 = vmatpush1.msra.mxu0 %v1553
        %1583 = vmatprep.subr.mxu0 0.0
        %1584 = vmatpush1.msra.mxu0 %v1554
        %1585 = vmatprep.subr.mxu0 0.0
        %1586 = vmatpush1.msra.mxu0 %v1555
        %1587 = vmatprep.subr.mxu0 0.0
        %1588 = vmatpush1.msra.mxu0 %v1556
        %1589 = vmatprep.subr.mxu0 0.0
        %1590 = vmatpush1.msra.mxu0 %v1557
        %1591 = vmatprep.subr.mxu0 0.0
        %1592 = vmatpush1.msra.mxu0 %v1558
        %1593 = vmatprep.subr.mxu0 0.0
        %1594 = vmatpush1.msra.mxu0 %v1559
        %1595 = vmatprep.subr.mxu0 0.0
        %1596 = vmatpush1.msra.mxu0 %v1560
        %1597 = vmatprep.subr.mxu0 0.0
        %1598 = vmatpush1.msra.mxu0 %v1561
        %1599 = vmatprep.subr.mxu0 0.0
        %1600 = vmatpush1.msra.mxu0 %v1562
        %1601 = vmatprep.subr.mxu0 0.0
        %1602 = vmatpush1.msra.mxu0 %v1563
        %1603 = vmatprep.subr.mxu0 0.0
        %1604 = vmatpush1.msra.mxu0 0.0
        %1605 = vmatprep.subr.mxu0 0.0
        %1606 = vmatpush1.msra.mxu0 0.0
        %1607 = vmatprep.subr.mxu0 0.0
        %1608 = vmatpush1.msra.mxu0 0.0
        %1609 = vmatprep.subr.mxu0 0.0
        %1610 = vmatpush1.msra.mxu0 0.0
        %1611 = vmatprep.subr.mxu0 0.0
        %1612 = vmatpush1.msra.mxu0 0.0
        %1613 = vmatprep.subr.mxu0 0.0
        %1614 = vmatpush1.msra.mxu0 0.0
        %1615 = vmatprep.subr.mxu0 0.0
        %1616 = vmatpush1.msra.mxu0 0.0
        %1617 = vmatprep.subr.mxu0 0.0
        %1618 = vmatpush1.msra.mxu0 0.0
        %1619 = vmatprep.subr.mxu0 0.0
        %1620 = vmatpush1.msra.mxu0 0.0
        %1621 = vmatprep.subr.mxu0 0.0
        %1622 = vmatpush1.msra.mxu0 0.0
        %1623 = vmatprep.subr.mxu0 0.0
        %1624 = vmatpush1.msra.mxu0 0.0
        %1625 = vmatprep.subr.mxu0 0.0
        %1626 = vmatpush1.msra.mxu0 0.0
        %1627 = vmatprep.subr.mxu0 0.0
        %1628 = vmatpush1.msra.mxu0 0.0
        %1629 = vmatprep.subr.mxu0 0.0
        %1630 = vmatpush1.msra.mxu0 0.0
        %1631 = vmatprep.subr.mxu0 0.0
        %1632 = vmatpush1.msra.mxu0 0.0
        %1633 = vmatprep.subr.mxu0 0.0
        %1634 = vmatpush1.msra.mxu0 0.0
        %1635 = vmatprep.mubr.f32.mxu0 0.0
        %1636 = vmatmul.mubr.f32.gmra.mrb[0].mxu0 %v1547
        %v1637 = vpop.f32.mrb[0].mxu0
        %v1638 = vadd.f32 %v1569, %v1637
        %v1639 = vpop.f32.mrb[0].mxu0
        %1640 = vdwg.mxu0
        %1641 = vst [vmem:[%s858] sm:$0x3] %v1638
        %s1642 = sand.u32 %s461, 1
        %s1643 = scalar_lea.sflag [#allocation4], %s1642
        %s1644 = sand.u32 %s461, 1
        %s1645 = smul.addr %s1644, 2
        %s1646 = scalar_lea.vmem [#allocation14], %s1645
        // Predicated region
        $region113: #{tpu_custom_call.1} parent=83 // pred_check
          %p1647 = pneg %p471
        $region114: #{tpu_custom_call.1} parent=83 // pred_check_branch
          %1649 = sbr.rel (%p1647) target = $region116
        $region115: #{tpu_custom_call.1} parent=83 // pred_region
          %s1651 = ssub.s32 32, 32
          %1652 = vsyncadd %s1643, %s1651
          %s1653 = smul.addr %s42, 32
          %s1654 = scalar_lea.hbm %s16, %s1653
          %s1656 = sshll.u32 %s1646, 4
          %s1657 = int_to_ptr.vmem [resolvable:$true] %s1656
          %1659 = dma.vmem_to_hbm [thread:$0]  %s1657, 32, %s1654, %s1643
        $region116: #{tpu_custom_call.1} parent=83 // pred_fallthru
          _
      $region84: #{tpu_custom_call.1} parent=5 // pred_fallthru
        _
      %p1660 = scmp.le.s32.totalorder 2, %s37
      // Predicated region
      $region117: #{tpu_custom_call.1} parent=5 // pred_check
        %p1661 = pneg %p1660
      $region118: #{tpu_custom_call.1} parent=5 // pred_check_branch
        %1663 = sbr.rel (%p1661) target = $region120
      $region119: #{tpu_custom_call.1} parent=5 // pred_region
        %s1664 = ssub.s32 %s37, 2
        // Predicated region
        $region121: #{tpu_custom_call.1} parent=119 // pred_check
          %p1665 = pneg %p477
        $region122: #{tpu_custom_call.1} parent=119 // pred_check_branch
          %1667 = sbr.rel (%p1665) target = $region124
        $region123: #{tpu_custom_call.1} parent=119 // pred_region
          %s1668 = sand.u32 %s462, 1
          %s1669 = scalar_lea.sflag [#allocation4], %s1668
          %s1670 = sand.u32 %s462, 1
          %s1671 = smul.addr %s1670, 2
          %s1672 = scalar_lea.vmem [#allocation14], %s1671
          %1673 = dma.done %s1669, 32
        $region124: #{tpu_custom_call.1} parent=119 // pred_fallthru
          _
      $region120: #{tpu_custom_call.1} parent=5 // pred_fallthru
        _
    $region6: #{tpu_custom_call.1} parent=1 // loop_footer
      %s41 = sadd.s32 1, %s37
    $region7: #{tpu_custom_call.1} parent=1 // loop_footer_branch
      %36 = sbr.rel target = $region3
    $region8: #{tpu_custom_call.1} parent=1 // loop_exit
      _
    %1674 = vsyncpa [#allocation3], 1
    %s1675 = scalar_lea.sflag [#allocation3], 1
    %1676 = vsyncpa %s1675, 1
    %1677 = vsyncpa [#allocation6], 1
    %s1678 = scalar_lea.sflag [#allocation6], 1
    %1679 = vsyncpa %s1678, 1
    %1680 = vsyncpa [#allocation9], 1
    %s1681 = scalar_lea.sflag [#allocation9], 1
    %1682 = vsyncpa %s1681, 1
    %1683 = vsyncpa [#allocation12], 1
    %s1684 = scalar_lea.sflag [#allocation12], 1
    %1685 = vsyncpa %s1684, 1
    %1686 = vsyncpa [#allocation4], 1
    %s1687 = scalar_lea.sflag [#allocation4], 1
    %1688 = vsyncpa %s1687, 1

</llo_original>
